<compile_context>
chip_gen: v7x
topology: tpu7x:2x2x1
jax: 0.10.0
libtpu: 0.0.40
codegen_flags: <defaults>
</compile_context>

<pallas_src>
import jax
import jax.numpy as jnp
import numpy as np
from jax.experimental import pallas as pl
from jax.experimental.pallas import tpu as pltpu


HIDDEN = 512                    # fixed by the module: Linear(2,512) -> ReLU -> Linear(512,dim)
_TARGET_BLOCK_BYTES = 4 << 20   # ~4 MiB x/y blocks (measured streaming-add sweet spot)


# ---------------------------------------------------------------------------
# Fused kernel:  o = x + relu(coords @ W1^T + b1) @ W2^T
#   coords/W1/b1/W2 are VMEM-resident (constant index_map); x/o are streamed
#   in batch tiles.  pos is recomputed per step (cheap, megacore-safe).
# ---------------------------------------------------------------------------
def _fused_pos_add_kernel(coords_ref, w1_ref, b1_ref, w2_ref, x_ref, o_ref):
    # --- positional MLP -----------------------------------------------------
    rows = coords_ref[:, 0:1]          # [L, 1]  normalized row coordinate
    cols = coords_ref[:, 1:2]          # [L, 1]  normalized col coordinate
    w1r = w1_ref[0:1, :]               # [1, H]  first-layer weights (row feature)
    w1c = w1_ref[1:2, :]               # [1, H]  first-layer weights (col feature)

    # First Linear (in_features=2): pure VPU broadcast math, no K=2 MXU dot.
    h = rows * w1r + cols * w1c + b1_ref[...]          # [L, H]
    h = jnp.maximum(h, 0.0)                            # ReLU

    # Second Linear (512 -> C): MXU matmul, f32 accumulation, full precision.
    pos = jnp.dot(h, w2_ref[...],
                  preferred_element_type=jnp.float32,
                  precision=jax.lax.Precision.HIGHEST)  # [L, C]

    # --- broadcast add over the batch tile ----------------------------------
    o_ref[...] = (x_ref[...].astype(jnp.float32) + pos).astype(o_ref.dtype)


def _pick_batch_tile(n, per_batch_elem_bytes):
    """Batch tile: big enough to amortize per-step overhead (~0.35 us), capped
    at ~4 MiB/block for VMEM, and >= 4 grid steps when N >= 4 so both v7x
    TensorCores get >= 2 pipelined steps each."""
    bt = max(1, _TARGET_BLOCK_BYTES // per_batch_elem_bytes)
    bt = min(n, bt)
    if n >= 4:
        bt = min(bt, max(1, n // 4))   # >= 4 steps -> >= 2 per v7x core
    elif n >= 2:
        bt = min(bt, max(1, n // 2))   # >= 2 steps -> both v7x cores busy
    return bt


def swin_pos_emb_mlp(x, w1, b1, w2, *, donate_x=False):
    """Pallas implementation of SwinPosEmbMLP.forward.

    Args:
      x:  [N, L, C] (f32 or bf16), L must be a perfect square (Swin window).
      w1: [512, 2]  PyTorch-style Linear weight (out, in).
      b1: [512]     first-layer bias.
      w2: [C, 512]  PyTorch-style Linear weight, no bias.
      donate_x: alias x's HBM buffer to the output (caller must donate x).
    Returns:
      y: [N, L, C], same dtype as x.
    """
    x = jnp.asarray(x)
    N, L, C = x.shape
    s = int(round(L ** 0.5))
    assert s * s == L and s >= 2, "sequence length must be a perfect square (>= 4)"
    H = w1.shape[0]

    # --- host-side constants (free): normalized coordinate grid -------------
    # Matches torch.meshgrid 'ij' + flatten(2) + transpose, with the
    # (v - s//2) / (s//2) normalization folded in, computed in f32.
    half = np.float32(s // 2)
    ci = np.arange(s, dtype=np.float32)
    gr, gc = np.meshgrid(ci, ci, indexing="ij")                  # gr[i,j]=i, gc[i,j]=j
    coords_np = np.stack([gr.reshape(-1), gc.reshape(-1)], -1)   # [L, 2], row-major
    coords = jnp.asarray((coords_np - half) / half, jnp.float32)

    w1_t = jnp.asarray(w1, jnp.float32).T              # [2, H]   (x @ W form)
    b1_2d = jnp.asarray(b1, jnp.float32).reshape(1, H)
    w2_t = jnp.asarray(w2, jnp.float32).T              # [H, C]

    # --- tiling / grid -------------------------------------------------------
    per_batch_elem_bytes = L * C * x.dtype.itemsize
    bt = _pick_batch_tile(N, per_batch_elem_bytes)
    grid = (pl.cdiv(N, bt),)                            # partial last block OK

    blk_bytes = bt * per_batch_elem_bytes
    const_bytes = (L * 2 + 3 * H + H * C) * 4
    # double-buffered x in + y out, resident constants, plus headroom
    vmem_limit = 4 * blk_bytes + 2 * const_bytes + (6 << 20)
    vmem_limit = int(min(max(vmem_limit, 16 << 20), 48 << 20))

    extra_kwargs = {}
    if donate_x:
        extra_kwargs["input_output_aliases"] = {4: 0}   # alias x (input 4) -> y

    y = pl.pallas_call(
        _fused_pos_add_kernel,
        out_shape=jax.ShapeDtypeStruct((N, L, C), x.dtype),
        grid_spec=pltpu.PrefetchScalarGridSpec(
            num_scalar_prefetch=0,
            grid=grid,
            in_specs=[
                pl.BlockSpec((L, 2), lambda b: (0, 0)),        # coords (resident)
                pl.BlockSpec((2, H), lambda b: (0, 0)),        # W1^T   (resident)
                pl.BlockSpec((1, H), lambda b: (0, 0)),        # b1     (resident)
                pl.BlockSpec((H, C), lambda b: (0, 0)),        # W2^T   (resident)
                pl.BlockSpec((bt, L, C), lambda b: (b, 0, 0)), # x batch tile
            ],
            out_specs=pl.BlockSpec((bt, L, C), lambda b: (b, 0, 0)),
        ),
        compiler_params=pltpu.CompilerParams(
            dimension_semantics=("parallel",),
            vmem_limit_bytes=vmem_limit,
        ),
        **extra_kwargs,
    )(coords, w1_t, b1_2d, w2_t, x)

    return y


# ---------------------------------------------------------------------------
# Pure-JAX reference mirroring the PyTorch forward.
# ---------------------------------------------------------------------------
def _reference(x, w1, b1, w2):
    hp = jax.lax.Precision.HIGHEST
    N, L, C = x.shape
    s = int(round(L ** 0.5))
    coords = jnp.arange(s, dtype=jnp.float32)
    gr, gc = jnp.meshgrid(coords, coords, indexing="ij")
    grid = jnp.stack([gr, gc])[None]                  # [1, 2, s, s]
    half = s // 2
    grid = (grid - half) / half
    g = grid.reshape(1, 2, s * s).transpose(0, 2, 1)  # [1, L, 2]
    h = jnp.einsum("npc,hc->nph", g, w1, precision=hp) + b1[None, None, :]
    h = jnp.maximum(h, 0.0)
    pe = jnp.einsum("nph,dh->npd", h, w2, precision=hp)  # [1, L, C]
    return (x.astype(jnp.float32) + pe).astype(x.dtype)


if __name__ == "__main__":
    key = jax.random.PRNGKey(0)
    kx, kw1, kb1, kw2 = jax.random.split(key, 4)

    # Small shapes consistent with the module: batch=2, Swin window 8x8 -> L=64,
    # dim=32, hidden=512 (fixed by the module).
    N, S_SIDE, C = 2, 8, 32
    L = S_SIDE * S_SIDE

    x = jax.random.normal(kx, (N, L, C), dtype=jnp.float32)

    # PyTorch nn.Linear default-style init (shapes: [out_features, in_features]).
    bound1 = 1.0 / np.sqrt(2.0)
    bound2 = 1.0 / np.sqrt(HIDDEN)
    w1 = jax.random.uniform(kw1, (HIDDEN, 2), jnp.float32, -bound1, bound1)
    b1 = jax.random.uniform(kb1, (HIDDEN,), jnp.float32, -bound1, bound1)
    w2 = jax.random.uniform(kw2, (C, HIDDEN), jnp.float32, -bound2, bound2)

    y = swin_pos_emb_mlp(x, w1, b1, w2)
    jax.block_until_ready(y)

    y_ref = _reference(x, w1, b1, w2)
    np.testing.assert_allclose(np.asarray(y), np.asarray(y_ref), rtol=1e-5, atol=1e-5)

    print("KERNEL_OK")
</pallas_src>

<mosaic_0001>
module attributes {stable_mosaic.version = 11 : i64} {
  func.func @_fused_pos_add_kernel(%arg0: i32, %arg1: memref<64x2xf32, #tpu.memory_space<vmem>>, %arg2: memref<2x512xf32, #tpu.memory_space<vmem>>, %arg3: memref<1x512xf32, #tpu.memory_space<vmem>>, %arg4: memref<512x32xf32, #tpu.memory_space<vmem>>, %arg5: memref<1x64x32xf32, #tpu.memory_space<vmem>>, %arg6: memref<1x64x32xf32, #tpu.memory_space<vmem>>) attributes {dimension_semantics = [#tpu.dimension_semantics<parallel>], iteration_bounds = array<i64: 2>, scalar_prefetch = 0 : i64, scratch_operands = 0 : i64, tpu.core_type = #tpu.core_type<tc>, window_params = [{pipeline_mode = #tpu.pipeline_mode<synchronous>, transform_indices = @transform_0, window_bounds = array<i64: 64, 2>}, {pipeline_mode = #tpu.pipeline_mode<synchronous>, transform_indices = @transform_1, window_bounds = array<i64: 2, 512>}, {pipeline_mode = #tpu.pipeline_mode<synchronous>, transform_indices = @transform_2, window_bounds = array<i64: 1, 512>}, {pipeline_mode = #tpu.pipeline_mode<synchronous>, transform_indices = @transform_3, window_bounds = array<i64: 512, 32>}, {transform_indices = @transform_4, window_bounds = array<i64: 1, 64, 32>}, {transform_indices = @transform_5, window_bounds = array<i64: 1, 64, 32>}]} {
    %c0 = arith.constant 0 : index
    %c0_0 = arith.constant 0 : index
    %0 = vector.load %arg1[%c0, %c0_0] : memref<64x2xf32, #tpu.memory_space<vmem>>, vector<64x1xf32>
    %c0_1 = arith.constant 0 : index
    %c1 = arith.constant 1 : index
    %1 = vector.load %arg1[%c0_1, %c1] : memref<64x2xf32, #tpu.memory_space<vmem>>, vector<64x1xf32>
    %c0_2 = arith.constant 0 : index
    %c0_3 = arith.constant 0 : index
    %2 = vector.load %arg2[%c0_2, %c0_3] : memref<2x512xf32, #tpu.memory_space<vmem>>, vector<1x512xf32>
    %c1_4 = arith.constant 1 : index
    %c0_5 = arith.constant 0 : index
    %3 = vector.load %arg2[%c1_4, %c0_5] : memref<2x512xf32, #tpu.memory_space<vmem>>, vector<1x512xf32>
    %4 = vector.broadcast %0 : vector<64x1xf32> to vector<64x512xf32>
    %5 = vector.broadcast %2 : vector<1x512xf32> to vector<64x512xf32>
    %6 = arith.mulf %4, %5 : vector<64x512xf32>
    %7 = vector.broadcast %1 : vector<64x1xf32> to vector<64x512xf32>
    %8 = vector.broadcast %3 : vector<1x512xf32> to vector<64x512xf32>
    %9 = arith.mulf %7, %8 : vector<64x512xf32>
    %10 = arith.addf %6, %9 : vector<64x512xf32>
    %c0_6 = arith.constant 0 : index
    %c0_7 = arith.constant 0 : index
    %11 = vector.load %arg3[%c0_6, %c0_7] : memref<1x512xf32, #tpu.memory_space<vmem>>, vector<1x512xf32>
    %12 = vector.broadcast %11 : vector<1x512xf32> to vector<64x512xf32>
    %13 = arith.addf %10, %12 : vector<64x512xf32>
    %cst = arith.constant 0.000000e+00 : f32
    %14 = vector.broadcast %cst : f32 to vector<64x512xf32>
    %15 = arith.maximumf %13, %14 : vector<64x512xf32>
    %c0_8 = arith.constant 0 : index
    %c0_9 = arith.constant 0 : index
    %16 = vector.load %arg4[%c0_8, %c0_9] : memref<512x32xf32, #tpu.memory_space<vmem>>, vector<512x32xf32>
    %cst_10 = arith.constant dense<0.000000e+00> : vector<64x32xf32>
    %17 = tpu.matmul %15, %16, %cst_10 {dimension_numbers = #tpu.dot_dimension_numbers<[1], [0], [0], [1], [0, 0, 1, 1], [], []>, precision = #tpu.contract_precision<fp32>} : vector<64x512xf32>, vector<512x32xf32>, vector<64x32xf32> -> vector<64x32xf32>
    %c0_11 = arith.constant 0 : index
    %c0_12 = arith.constant 0 : index
    %c0_13 = arith.constant 0 : index
    %18 = vector.load %arg5[%c0_11, %c0_12, %c0_13] : memref<1x64x32xf32, #tpu.memory_space<vmem>>, vector<1x64x32xf32>
    %19 = vector.shape_cast %17 : vector<64x32xf32> to vector<1x64x32xf32>
    %20 = arith.addf %18, %19 : vector<1x64x32xf32>
    %c0_14 = arith.constant 0 : index
    %c0_15 = arith.constant 0 : index
    %c0_16 = arith.constant 0 : index
    %21 = vector.load %arg6[%c0_14, %c0_15, %c0_16] : memref<1x64x32xf32, #tpu.memory_space<vmem>>, vector<1x64x32xf32>
    tpu.vector_store %arg6[%c0_14, %c0_15, %c0_16], %20 {strides = array<i32>} : memref<1x64x32xf32, #tpu.memory_space<vmem>>, vector<1x64x32xf32>,
    return
  }
  func.func @transform_0(%arg0: i32) -> (i32, i32) {
    %c0_i32 = arith.constant 0 : i32
    %c0_i32_0 = arith.constant 0 : i32
    %c0_i32_1 = arith.constant 0 : i32
    return %c0_i32, %c0_i32_0 : i32, i32
  }
  func.func @transform_1(%arg0: i32) -> (i32, i32) {
    %c0_i32 = arith.constant 0 : i32
    %c0_i32_0 = arith.constant 0 : i32
    %c0_i32_1 = arith.constant 0 : i32
    return %c0_i32, %c0_i32_0 : i32, i32
  }
  func.func @transform_2(%arg0: i32) -> (i32, i32) {
    %c0_i32 = arith.constant 0 : i32
    %c0_i32_0 = arith.constant 0 : i32
    %c0_i32_1 = arith.constant 0 : i32
    return %c0_i32, %c0_i32_0 : i32, i32
  }
  func.func @transform_3(%arg0: i32) -> (i32, i32) {
    %c0_i32 = arith.constant 0 : i32
    %c0_i32_0 = arith.constant 0 : i32
    %c0_i32_1 = arith.constant 0 : i32
    return %c0_i32, %c0_i32_0 : i32, i32
  }
  func.func @transform_4(%arg0: i32) -> (i32, i32, i32) {
    %c0_i32 = arith.constant 0 : i32
    %c0_i32_0 = arith.constant 0 : i32
    %c0_i32_1 = arith.constant 0 : i32
    return %arg0, %c0_i32, %c0_i32_0 : i32, i32, i32
  }
  func.func @transform_5(%arg0: i32) -> (i32, i32, i32) {
    %c0_i32 = arith.constant 0 : i32
    %c0_i32_0 = arith.constant 0 : i32
    %c0_i32_1 = arith.constant 0 : i32
    return %arg0, %c0_i32, %c0_i32_0 : i32, i32, i32
  }
}

</mosaic_0001>

<llo_original>
// kernel: tpu_custom_call.1
$region0: #{tpu_custom_call.1}
  #allocation0 [shape = 'u32[]', space=smem, size = 0x4, offset = 0x4, fixed_abs, tag = 'smem constant byte address 0x4 - core index']
  #allocation1 [shape = 'u32[144,128]{1,0:T(1,128)}', space=vmem, size = 0x12000, scoped, tag = 'internal scratch']
  %s0 = inlined_call_operand.vmem [shape: f32[64,2], index: 0, kind: input, shape index: {}]
  %s1 = inlined_call_operand.vmem [shape: f32[2,512], index: 1, kind: input, shape index: {}]
  %s2 = inlined_call_operand.vmem [shape: f32[1,512], index: 2, kind: input, shape index: {}]
  %s3 = inlined_call_operand.vmem [shape: f32[512,32], index: 3, kind: input, shape index: {}]
  %s4 = inlined_call_operand.vmem [shape: f32[2,64,32], index: 4, kind: input, shape index: {}]
  %s5 = inlined_call_operand.vmem [shape: f32[2,64,32], index: 5, kind: output, shape index: {}]
  %s6 = sld [smem:[#allocation0]]
  $region53: #{tpu_custom_call.1} parent=0
    _
  %s8 = ssub.s32 1, %s6
  %s9 = scalar_select 0, %s8, %s6
  loop: start=0, step=1, limit=4
  $region2: #{tpu_custom_call.1} parent=0 // loop_pre_header
    _
  $region3: #{tpu_custom_call.1} parent=0 // loop_header
    %s11 = sphi 0, %s15
    %p12 = scmp.ge.s32.totalorder %s11, 4
    %s19 = sphi 0, %s19
    %s21 = sphi 0, %s19
    %s22 = sphi 0, %s21
    %s36 = sphi 0, %s22
    %s40 = sphi 0, %s40
    %s42 = sphi 0, %s40
    %s43 = sphi 0, %s42
    %s57 = sphi 0, %s43
    %s61 = sphi 0, %s61
    %s63 = sphi 0, %s61
    %s64 = sphi 0, %s63
    %s78 = sphi 0, %s64
    %s82 = sphi 0, %s82
    %s84 = sphi 0, %s82
    %s85 = sphi 0, %s84
    %s99 = sphi 0, %s85
    %s105 = sphi 0, %s107
    %s108 = sphi 0, %s105
    %s109 = sphi 0, %s108
    %s125 = sphi 0, %s109
    %s131 = sphi 0, %s133
    %s134 = sphi 0, %s131
    %s135 = sphi 0, %s134
    %s151 = sphi 0, %s135
  $region4: #{tpu_custom_call.1} parent=0 // loop_header_branch
    %14 = sbr.rel (%p12) target = $region8
  $region5: #{tpu_custom_call.1} parent=0 // loop_body
    %s16 = ssub.s32 %s11, 1
    %s17 = ssub.s32 %s11, 2
    %s18 = sadd.s32 %s11, 1
    %s20 = sadd.s32 %s19, 1
    %p23 = scmp.eq.s32.totalorder %s11, 1
    %p24 = scmp.ne.s32.totalorder %s19, %s21
    %p25 = scmp.eq.s32.totalorder %s11, 0
    %p26 = por %p24, %p25
    %p27 = scmp.ne.s32.totalorder %s19, %s21
    %p28 = scmp.eq.s32.totalorder %s16, 1
    %p29 = por %p27, %p28
    %p30 = scmp.ne.s32.totalorder %s21, %s22
    %p31 = scmp.eq.s32.totalorder %s16, 0
    %p32 = por %p30, %p31
    %p33 = scmp.ne.s32.totalorder %s21, %s22
    %p34 = scmp.eq.s32.totalorder %s17, 1
    %p35 = por %p33, %p34
    %p37 = scmp.ne.s32.totalorder %s22, %s36
    %p38 = scmp.eq.s32.totalorder %s17, 0
    %p39 = por %p37, %p38
    %s41 = sadd.s32 %s40, 1
    %p44 = scmp.eq.s32.totalorder %s11, 1
    %p45 = scmp.ne.s32.totalorder %s40, %s42
    %p46 = scmp.eq.s32.totalorder %s11, 0
    %p47 = por %p45, %p46
    %p48 = scmp.ne.s32.totalorder %s40, %s42
    %p49 = scmp.eq.s32.totalorder %s16, 1
    %p50 = por %p48, %p49
    %p51 = scmp.ne.s32.totalorder %s42, %s43
    %p52 = scmp.eq.s32.totalorder %s16, 0
    %p53 = por %p51, %p52
    %p54 = scmp.ne.s32.totalorder %s42, %s43
    %p55 = scmp.eq.s32.totalorder %s17, 1
    %p56 = por %p54, %p55
    %p58 = scmp.ne.s32.totalorder %s43, %s57
    %p59 = scmp.eq.s32.totalorder %s17, 0
    %p60 = por %p58, %p59
    %s62 = sadd.s32 %s61, 1
    %p65 = scmp.eq.s32.totalorder %s11, 1
    %p66 = scmp.ne.s32.totalorder %s61, %s63
    %p67 = scmp.eq.s32.totalorder %s11, 0
    %p68 = por %p66, %p67
    %p69 = scmp.ne.s32.totalorder %s61, %s63
    %p70 = scmp.eq.s32.totalorder %s16, 1
    %p71 = por %p69, %p70
    %p72 = scmp.ne.s32.totalorder %s63, %s64
    %p73 = scmp.eq.s32.totalorder %s16, 0
    %p74 = por %p72, %p73
    %p75 = scmp.ne.s32.totalorder %s63, %s64
    %p76 = scmp.eq.s32.totalorder %s17, 1
    %p77 = por %p75, %p76
    %p79 = scmp.ne.s32.totalorder %s64, %s78
    %p80 = scmp.eq.s32.totalorder %s17, 0
    %p81 = por %p79, %p80
    %s83 = sadd.s32 %s82, 1
    %p86 = scmp.eq.s32.totalorder %s11, 1
    %p87 = scmp.ne.s32.totalorder %s82, %s84
    %p88 = scmp.eq.s32.totalorder %s11, 0
    %p89 = por %p87, %p88
    %p90 = scmp.ne.s32.totalorder %s82, %s84
    %p91 = scmp.eq.s32.totalorder %s16, 1
    %p92 = por %p90, %p91
    %p93 = scmp.ne.s32.totalorder %s84, %s85
    %p94 = scmp.eq.s32.totalorder %s16, 0
    %p95 = por %p93, %p94
    %p96 = scmp.ne.s32.totalorder %s84, %s85
    %p97 = scmp.eq.s32.totalorder %s17, 1
    %p98 = por %p96, %p97
    %p100 = scmp.ne.s32.totalorder %s85, %s99
    %p101 = scmp.eq.s32.totalorder %s17, 0
    %p102 = por %p100, %p101
    %s103 = ssub.s32 %s11, %s18
    %p104 = scmp.eq.s32.totalorder %s103, 0
    %s106 = sadd.s32 %s105, 1
    %s107 = scalar_select %p104, %s105, %s106
    %p110 = pneg %p104
    %p111 = scmp.eq.s32.totalorder %s11, 1
    %p112 = por %p110, %p111
    %p113 = scmp.ne.s32.totalorder %s105, %s108
    %p114 = scmp.eq.s32.totalorder %s11, 0
    %p115 = por %p113, %p114
    %p116 = scmp.ne.s32.totalorder %s105, %s108
    %p117 = scmp.eq.s32.totalorder %s16, 1
    %p118 = por %p116, %p117
    %p119 = scmp.ne.s32.totalorder %s108, %s109
    %p120 = scmp.eq.s32.totalorder %s16, 0
    %p121 = por %p119, %p120
    %p122 = scmp.ne.s32.totalorder %s108, %s109
    %p123 = scmp.eq.s32.totalorder %s17, 1
    %p124 = por %p122, %p123
    %p126 = scmp.ne.s32.totalorder %s109, %s125
    %p127 = scmp.eq.s32.totalorder %s17, 0
    %p128 = por %p126, %p127
    %s129 = ssub.s32 %s11, %s18
    %p130 = scmp.eq.s32.totalorder %s129, 0
    %s132 = sadd.s32 %s131, 1
    %s133 = scalar_select %p130, %s131, %s132
    %p136 = pneg %p130
    %p137 = scmp.eq.s32.totalorder %s11, 1
    %p138 = por %p136, %p137
    %p139 = scmp.ne.s32.totalorder %s131, %s134
    %p140 = scmp.eq.s32.totalorder %s11, 0
    %p141 = por %p139, %p140
    %p142 = scmp.ne.s32.totalorder %s131, %s134
    %p143 = scmp.eq.s32.totalorder %s16, 1
    %p144 = por %p142, %p143
    %p145 = scmp.ne.s32.totalorder %s134, %s135
    %p146 = scmp.eq.s32.totalorder %s16, 0
    %p147 = por %p145, %p146
    %p148 = scmp.ne.s32.totalorder %s134, %s135
    %p149 = scmp.eq.s32.totalorder %s17, 1
    %p150 = por %p148, %p149
    %p152 = scmp.ne.s32.totalorder %s135, %s151
    %p153 = scmp.eq.s32.totalorder %s17, 0
    %p154 = por %p152, %p153
    %p155 = scmp.le.s32.totalorder 1, %s11
    %p156 = scmp.lt.s32.totalorder %s11, 3
    %p157 = pnand %p155, %p156
    %p158 = pneg %p157
    // Predicated region
    $region9: #{tpu_custom_call.1} parent=5 // pred_check
      _
    $region10: #{tpu_custom_call.1} parent=5 // pred_check_branch
      %160 = sbr.rel (%p157) target = $region12
    $region11: #{tpu_custom_call.1} parent=5 // pred_region
      %s161 = ssub.s32 %s11, 1
      // Predicated region
      $region13: #{tpu_custom_call.1} parent=11 // pred_check
        %p162 = pneg %p32
      $region14: #{tpu_custom_call.1} parent=11 // pred_check_branch
        %164 = sbr.rel (%p162) target = $region16
      $region15: #{tpu_custom_call.1} parent=11 // pred_region
        _
      $region16: #{tpu_custom_call.1} parent=11 // pred_fallthru
        _
      // Predicated region
      $region17: #{tpu_custom_call.1} parent=11 // pred_check
        %p165 = pneg %p53
      $region18: #{tpu_custom_call.1} parent=11 // pred_check_branch
        %167 = sbr.rel (%p165) target = $region20
      $region19: #{tpu_custom_call.1} parent=11 // pred_region
        _
      $region20: #{tpu_custom_call.1} parent=11 // pred_fallthru
        _
      // Predicated region
      $region21: #{tpu_custom_call.1} parent=11 // pred_check
        %p168 = pneg %p74
      $region22: #{tpu_custom_call.1} parent=11 // pred_check_branch
        %170 = sbr.rel (%p168) target = $region24
      $region23: #{tpu_custom_call.1} parent=11 // pred_region
        _
      $region24: #{tpu_custom_call.1} parent=11 // pred_fallthru
        _
      // Predicated region
      $region25: #{tpu_custom_call.1} parent=11 // pred_check
        %p171 = pneg %p95
      $region26: #{tpu_custom_call.1} parent=11 // pred_check_branch
        %173 = sbr.rel (%p171) target = $region28
      $region27: #{tpu_custom_call.1} parent=11 // pred_region
        _
      $region28: #{tpu_custom_call.1} parent=11 // pred_fallthru
        _
    $region12: #{tpu_custom_call.1} parent=5 // pred_fallthru
      _
    %p174 = scmp.lt.s32.totalorder %s11, 2
    // Predicated region
    $region29: #{tpu_custom_call.1} parent=5 // pred_check
      %p175 = pneg %p174
    $region30: #{tpu_custom_call.1} parent=5 // pred_check_branch
      %177 = sbr.rel (%p175) target = $region32
    $region31: #{tpu_custom_call.1} parent=5 // pred_region
      // Predicated region
      $region33: #{tpu_custom_call.1} parent=31 // pred_check
        %p178 = pneg %p115
      $region34: #{tpu_custom_call.1} parent=31 // pred_check_branch
        %180 = sbr.rel (%p178) target = $region36
      $region35: #{tpu_custom_call.1} parent=31 // pred_region
        %p181 = scmp.lt.s32.totalorder %s11, 1
        %s182 = scalar_select %p181, %s11, 1
        %s183 = smul.addr %s182, 8
        %s184 = smul.addr %s183, 8
        %s185 = scalar_lea.vmem %s4, %s184
      $region36: #{tpu_custom_call.1} parent=31 // pred_fallthru
        _
    $region32: #{tpu_custom_call.1} parent=5 // pred_fallthru
      _
    %p186 = scmp.le.s32.totalorder 1, %s11
    %p187 = scmp.lt.s32.totalorder %s11, 3
    %p188 = pnand %p186, %p187
    %p189 = pneg %p188
    // Predicated region
    $region37: #{tpu_custom_call.1} parent=5 // pred_check
      _
    $region38: #{tpu_custom_call.1} parent=5 // pred_check_branch
      %191 = sbr.rel (%p188) target = $region40
    $region39: #{tpu_custom_call.1} parent=5 // pred_region
      %s192 = ssub.s32 %s11, 1
      %p193 = pneg %p32
      %p194 = pneg %p29
      %p195 = pneg %p53
      %p196 = pneg %p50
      %p197 = pneg %p74
      %p198 = pneg %p71
      %p199 = pneg %p95
      %p200 = pneg %p92
      %p201 = scmp.lt.s32.totalorder %s16, 1
      %s202 = scalar_select %p201, %s16, 1
      %s203 = smul.addr %s202, 8
      %s204 = smul.addr %s203, 8
      %s205 = scalar_lea.vmem %s4, %s204
      %p206 = pneg %p121
      %p207 = pneg %p118
      %p208 = pneg %p147
      %p209 = pneg %p144
      %p210 = scmp.lt.s32.totalorder %s16, 1
      %s211 = scalar_select %p210, %s16, 1
      %s212 = smul.addr %s211, 8
      %s213 = smul.addr %s212, 8
      %s214 = scalar_lea.vmem %s5, %s213
      %p215 = scmp.lt.s32.totalorder %s16, 1
      %s216 = scalar_select %p215, %s16, 1
      %s217 = smul.addr %s216, 8
      %s218 = smul.addr %s217, 8
      %s219 = scalar_lea.vmem %s4, %s218
      %p220 = scmp.lt.s32.totalorder %s16, 1
      %s221 = scalar_select %p220, %s16, 1
      %s222 = smul.addr %s221, 8
      %s223 = smul.addr %s222, 8
      %s224 = scalar_lea.vmem %s5, %s223
      %v225 = vld [vmem:[%s0] sm:$0xff]
      %v226 = vld [vmem:[%s0 + $0x8] sm:$0xff]
      %v227 = vld [vmem:[%s0 + $0x10] sm:$0xff]
      %v228 = vld [vmem:[%s0 + $0x18] sm:$0xff]
      %v229 = vld [vmem:[%s0 + $0x20] sm:$0xff]
      %v230 = vld [vmem:[%s0 + $0x28] sm:$0xff]
      %v231 = vld [vmem:[%s0 + $0x30] sm:$0xff]
      %v232 = vld [vmem:[%s0 + $0x38] sm:$0xff]
      %v233 = vld [vmem:[%s1] ss:$2 sm:$0xf]
      %s234 = scalar_lea.vmem %s1, 1
      %v235 = vld [vmem:[%s234] ss:$2 sm:$0xf]
      %237 = vset.pattern.permute.xlu0 0
      %238 = vperm.xlu0 %237, %v225
      %v239 = vpop.permute.xlu0 %238
      %242 = vset.pattern.permute.xlu0 0
      %243 = vperm.xlu0 %242, %v226
      %v244 = vpop.permute.xlu0 %243
      %247 = vset.pattern.permute.xlu0 0
      %248 = vperm.xlu0 %247, %v227
      %v249 = vpop.permute.xlu0 %248
      %252 = vset.pattern.permute.xlu0 0
      %253 = vperm.xlu0 %252, %v228
      %v254 = vpop.permute.xlu0 %253
      %257 = vset.pattern.permute.xlu0 0
      %258 = vperm.xlu0 %257, %v229
      %v259 = vpop.permute.xlu0 %258
      %262 = vset.pattern.permute.xlu0 0
      %263 = vperm.xlu0 %262, %v230
      %v264 = vpop.permute.xlu0 %263
      %267 = vset.pattern.permute.xlu0 0
      %268 = vperm.xlu0 %267, %v231
      %v269 = vpop.permute.xlu0 %268
      %272 = vset.pattern.permute.xlu0 0
      %273 = vperm.xlu0 %272, %v232
      %v274 = vpop.permute.xlu0 %273
      %v277 = vlaneseq
      %v278 = vshrl.u32 %v277, 7
      %v279 = vsub.s32 0, %v278
      %v280 = vrot.slane %v233, %v279
      %v281 = vlaneseq
      %v282 = vshrl.u32 %v281, 7
      %v283 = vsub.s32 1, %v282
      %v284 = vrot.slane %v233, %v283
      %v285 = vlaneseq
      %v286 = vshrl.u32 %v285, 7
      %v287 = vsub.s32 2, %v286
      %v288 = vrot.slane %v233, %v287
      %v289 = vlaneseq
      %v290 = vshrl.u32 %v289, 7
      %v291 = vsub.s32 3, %v290
      %v292 = vrot.slane %v233, %v291
      %v297 = vmul.f32 %v239, %v280
      %v298 = vmul.f32 %v239, %v284
      %v299 = vmul.f32 %v239, %v288
      %v300 = vmul.f32 %v239, %v292
      %v301 = vmul.f32 %v244, %v280
      %v302 = vmul.f32 %v244, %v284
      %v303 = vmul.f32 %v244, %v288
      %v304 = vmul.f32 %v244, %v292
      %v305 = vmul.f32 %v249, %v280
      %v306 = vmul.f32 %v249, %v284
      %v307 = vmul.f32 %v249, %v288
      %v308 = vmul.f32 %v249, %v292
      %v309 = vmul.f32 %v254, %v280
      %v310 = vmul.f32 %v254, %v284
      %v311 = vmul.f32 %v254, %v288
      %v312 = vmul.f32 %v254, %v292
      %v313 = vmul.f32 %v259, %v280
      %v314 = vmul.f32 %v259, %v284
      %v315 = vmul.f32 %v259, %v288
      %v316 = vmul.f32 %v259, %v292
      %v317 = vmul.f32 %v264, %v280
      %v318 = vmul.f32 %v264, %v284
      %v319 = vmul.f32 %v264, %v288
      %v320 = vmul.f32 %v264, %v292
      %v321 = vmul.f32 %v269, %v280
      %v322 = vmul.f32 %v269, %v284
      %v323 = vmul.f32 %v269, %v288
      %v324 = vmul.f32 %v269, %v292
      %v325 = vmul.f32 %v274, %v280
      %v326 = vmul.f32 %v274, %v284
      %v327 = vmul.f32 %v274, %v288
      %v328 = vmul.f32 %v274, %v292
      %329 = vset.pattern.permute.xlu0 1
      %330 = vperm.xlu0 %329, %v225
      %v331 = vpop.permute.xlu0 %330
      %333 = vset.pattern.permute.xlu0 1
      %334 = vperm.xlu0 %333, %v226
      %v335 = vpop.permute.xlu0 %334
      %337 = vset.pattern.permute.xlu0 1
      %338 = vperm.xlu0 %337, %v227
      %v339 = vpop.permute.xlu0 %338
      %341 = vset.pattern.permute.xlu0 1
      %342 = vperm.xlu0 %341, %v228
      %v343 = vpop.permute.xlu0 %342
      %345 = vset.pattern.permute.xlu0 1
      %346 = vperm.xlu0 %345, %v229
      %v347 = vpop.permute.xlu0 %346
      %349 = vset.pattern.permute.xlu0 1
      %350 = vperm.xlu0 %349, %v230
      %v351 = vpop.permute.xlu0 %350
      %353 = vset.pattern.permute.xlu0 1
      %354 = vperm.xlu0 %353, %v231
      %v355 = vpop.permute.xlu0 %354
      %357 = vset.pattern.permute.xlu0 1
      %358 = vperm.xlu0 %357, %v232
      %v359 = vpop.permute.xlu0 %358
      %v362 = vlaneseq
      %v363 = vshrl.u32 %v362, 7
      %v364 = vsub.s32 0, %v363
      %v365 = vrot.slane %v235, %v364
      %v366 = vlaneseq
      %v367 = vshrl.u32 %v366, 7
      %v368 = vsub.s32 1, %v367
      %v369 = vrot.slane %v235, %v368
      %v370 = vlaneseq
      %v371 = vshrl.u32 %v370, 7
      %v372 = vsub.s32 2, %v371
      %v373 = vrot.slane %v235, %v372
      %v374 = vlaneseq
      %v375 = vshrl.u32 %v374, 7
      %v376 = vsub.s32 3, %v375
      %v377 = vrot.slane %v235, %v376
      %v382 = vmul.f32 %v331, %v365
      %v383 = vmul.f32 %v331, %v369
      %v384 = vmul.f32 %v331, %v373
      %v385 = vmul.f32 %v331, %v377
      %v386 = vmul.f32 %v335, %v365
      %v387 = vmul.f32 %v335, %v369
      %v388 = vmul.f32 %v335, %v373
      %v389 = vmul.f32 %v335, %v377
      %v390 = vmul.f32 %v339, %v365
      %v391 = vmul.f32 %v339, %v369
      %v392 = vmul.f32 %v339, %v373
      %v393 = vmul.f32 %v339, %v377
      %v394 = vmul.f32 %v343, %v365
      %v395 = vmul.f32 %v343, %v369
      %v396 = vmul.f32 %v343, %v373
      %v397 = vmul.f32 %v343, %v377
      %v398 = vmul.f32 %v347, %v365
      %v399 = vmul.f32 %v347, %v369
      %v400 = vmul.f32 %v347, %v373
      %v401 = vmul.f32 %v347, %v377
      %v402 = vmul.f32 %v351, %v365
      %v403 = vmul.f32 %v351, %v369
      %v404 = vmul.f32 %v351, %v373
      %v405 = vmul.f32 %v351, %v377
      %v406 = vmul.f32 %v355, %v365
      %v407 = vmul.f32 %v355, %v369
      %v408 = vmul.f32 %v355, %v373
      %v409 = vmul.f32 %v355, %v377
      %v410 = vmul.f32 %v359, %v365
      %v411 = vmul.f32 %v359, %v369
      %v412 = vmul.f32 %v359, %v373
      %v413 = vmul.f32 %v359, %v377
      %v414 = vadd.f32 %v297, %v382
      %v415 = vadd.f32 %v298, %v383
      %v416 = vadd.f32 %v299, %v384
      %v417 = vadd.f32 %v300, %v385
      %v418 = vadd.f32 %v301, %v386
      %v419 = vadd.f32 %v302, %v387
      %v420 = vadd.f32 %v303, %v388
      %v421 = vadd.f32 %v304, %v389
      %v422 = vadd.f32 %v305, %v390
      %v423 = vadd.f32 %v306, %v391
      %v424 = vadd.f32 %v307, %v392
      %v425 = vadd.f32 %v308, %v393
      %v426 = vadd.f32 %v309, %v394
      %v427 = vadd.f32 %v310, %v395
      %v428 = vadd.f32 %v311, %v396
      %v429 = vadd.f32 %v312, %v397
      %v430 = vadd.f32 %v313, %v398
      %v431 = vadd.f32 %v314, %v399
      %v432 = vadd.f32 %v315, %v400
      %v433 = vadd.f32 %v316, %v401
      %v434 = vadd.f32 %v317, %v402
      %v435 = vadd.f32 %v318, %v403
      %v436 = vadd.f32 %v319, %v404
      %v437 = vadd.f32 %v320, %v405
      %v438 = vadd.f32 %v321, %v406
      %v439 = vadd.f32 %v322, %v407
      %v440 = vadd.f32 %v323, %v408
      %v441 = vadd.f32 %v324, %v409
      %v442 = vadd.f32 %v325, %v410
      %v443 = vadd.f32 %v326, %v411
      %v444 = vadd.f32 %v327, %v412
      %v445 = vadd.f32 %v328, %v413
      %v446 = vld [vmem:[%s2] sm:$0xf]
      %v448 = vlaneseq
      %v449 = vshrl.u32 %v448, 7
      %v450 = vsub.s32 0, %v449
      %v451 = vrot.slane %v446, %v450
      %v452 = vlaneseq
      %v453 = vshrl.u32 %v452, 7
      %v454 = vsub.s32 1, %v453
      %v455 = vrot.slane %v446, %v454
      %v456 = vlaneseq
      %v457 = vshrl.u32 %v456, 7
      %v458 = vsub.s32 2, %v457
      %v459 = vrot.slane %v446, %v458
      %v460 = vlaneseq
      %v461 = vshrl.u32 %v460, 7
      %v462 = vsub.s32 3, %v461
      %v463 = vrot.slane %v446, %v462
      %v468 = vadd.f32 %v414, %v451
      %v469 = vadd.f32 %v415, %v455
      %v470 = vadd.f32 %v416, %v459
      %v471 = vadd.f32 %v417, %v463
      %v472 = vadd.f32 %v418, %v451
      %v473 = vadd.f32 %v419, %v455
      %v474 = vadd.f32 %v420, %v459
      %v475 = vadd.f32 %v421, %v463
      %v476 = vadd.f32 %v422, %v451
      %v477 = vadd.f32 %v423, %v455
      %v478 = vadd.f32 %v424, %v459
      %v479 = vadd.f32 %v425, %v463
      %v480 = vadd.f32 %v426, %v451
      %v481 = vadd.f32 %v427, %v455
      %v482 = vadd.f32 %v428, %v459
      %v483 = vadd.f32 %v429, %v463
      %v484 = vadd.f32 %v430, %v451
      %v485 = vadd.f32 %v431, %v455
      %v486 = vadd.f32 %v432, %v459
      %v487 = vadd.f32 %v433, %v463
      %v488 = vadd.f32 %v434, %v451
      %v489 = vadd.f32 %v435, %v455
      %v490 = vadd.f32 %v436, %v459
      %v491 = vadd.f32 %v437, %v463
      %v492 = vadd.f32 %v438, %v451
      %v493 = vadd.f32 %v439, %v455
      %v494 = vadd.f32 %v440, %v459
      %v495 = vadd.f32 %v441, %v463
      %v496 = vadd.f32 %v442, %v451
      %v497 = vadd.f32 %v443, %v455
      %v498 = vadd.f32 %v444, %v459
      %v499 = vadd.f32 %v445, %v463
      %v500 = vmax.f32 %v468, 0.0
      %v501 = vmax.f32 %v469, 0.0
      %v502 = vmax.f32 %v470, 0.0
      %v503 = vmax.f32 %v471, 0.0
      %v504 = vmax.f32 %v472, 0.0
      %v505 = vmax.f32 %v473, 0.0
      %v506 = vmax.f32 %v474, 0.0
      %v507 = vmax.f32 %v475, 0.0
      %v508 = vmax.f32 %v476, 0.0
      %v509 = vmax.f32 %v477, 0.0
      %v510 = vmax.f32 %v478, 0.0
      %v511 = vmax.f32 %v479, 0.0
      %v512 = vmax.f32 %v480, 0.0
      %v513 = vmax.f32 %v481, 0.0
      %v514 = vmax.f32 %v482, 0.0
      %v515 = vmax.f32 %v483, 0.0
      %v516 = vmax.f32 %v484, 0.0
      %v517 = vmax.f32 %v485, 0.0
      %v518 = vmax.f32 %v486, 0.0
      %v519 = vmax.f32 %v487, 0.0
      %v520 = vmax.f32 %v488, 0.0
      %v521 = vmax.f32 %v489, 0.0
      %v522 = vmax.f32 %v490, 0.0
      %v523 = vmax.f32 %v491, 0.0
      %v524 = vmax.f32 %v492, 0.0
      %v525 = vmax.f32 %v493, 0.0
      %v526 = vmax.f32 %v494, 0.0
      %v527 = vmax.f32 %v495, 0.0
      %v528 = vmax.f32 %v496, 0.0
      %v529 = vmax.f32 %v497, 0.0
      %v530 = vmax.f32 %v498, 0.0
      %v531 = vmax.f32 %v499, 0.0
      %v532 = vld [vmem:[%s3] sm:$0xff]
      %v533 = vld [vmem:[%s3 + $0x8] sm:$0xff]
      %v534 = vld [vmem:[%s3 + $0x10] sm:$0xff]
      %v535 = vld [vmem:[%s3 + $0x18] sm:$0xff]
      %v536 = vld [vmem:[%s3 + $0x20] sm:$0xff]
      %v537 = vld [vmem:[%s3 + $0x28] sm:$0xff]
      %v538 = vld [vmem:[%s3 + $0x30] sm:$0xff]
      %v539 = vld [vmem:[%s3 + $0x38] sm:$0xff]
      %v540 = vld [vmem:[%s3 + $0x40] sm:$0xff]
      %v541 = vld [vmem:[%s3 + $0x48] sm:$0xff]
      %v542 = vld [vmem:[%s3 + $0x50] sm:$0xff]
      %v543 = vld [vmem:[%s3 + $0x58] sm:$0xff]
      %v544 = vld [vmem:[%s3 + $0x60] sm:$0xff]
      %v545 = vld [vmem:[%s3 + $0x68] sm:$0xff]
      %v546 = vld [vmem:[%s3 + $0x70] sm:$0xff]
      %v547 = vld [vmem:[%s3 + $0x78] sm:$0xff]
      %v548 = vld [vmem:[%s3 + $0x80] sm:$0xff]
      %v549 = vld [vmem:[%s3 + $0x88] sm:$0xff]
      %v550 = vld [vmem:[%s3 + $0x90] sm:$0xff]
      %v551 = vld [vmem:[%s3 + $0x98] sm:$0xff]
      %v552 = vld [vmem:[%s3 + $0xa0] sm:$0xff]
      %v553 = vld [vmem:[%s3 + $0xa8] sm:$0xff]
      %v554 = vld [vmem:[%s3 + $0xb0] sm:$0xff]
      %v555 = vld [vmem:[%s3 + $0xb8] sm:$0xff]
      %v556 = vld [vmem:[%s3 + $0xc0] sm:$0xff]
      %v557 = vld [vmem:[%s3 + $0xc8] sm:$0xff]
      %v558 = vld [vmem:[%s3 + $0xd0] sm:$0xff]
      %v559 = vld [vmem:[%s3 + $0xd8] sm:$0xff]
      %v560 = vld [vmem:[%s3 + $0xe0] sm:$0xff]
      %v561 = vld [vmem:[%s3 + $0xe8] sm:$0xff]
      %v562 = vld [vmem:[%s3 + $0xf0] sm:$0xff]
      %v563 = vld [vmem:[%s3 + $0xf8] sm:$0xff]
      %v564 = vld [vmem:[%s3 + $0x100] sm:$0xff]
      %v565 = vld [vmem:[%s3 + $0x108] sm:$0xff]
      %v566 = vld [vmem:[%s3 + $0x110] sm:$0xff]
      %v567 = vld [vmem:[%s3 + $0x118] sm:$0xff]
      %v568 = vld [vmem:[%s3 + $0x120] sm:$0xff]
      %v569 = vld [vmem:[%s3 + $0x128] sm:$0xff]
      %v570 = vld [vmem:[%s3 + $0x130] sm:$0xff]
      %v571 = vld [vmem:[%s3 + $0x138] sm:$0xff]
      %v572 = vld [vmem:[%s3 + $0x140] sm:$0xff]
      %v573 = vld [vmem:[%s3 + $0x148] sm:$0xff]
      %v574 = vld [vmem:[%s3 + $0x150] sm:$0xff]
      %v575 = vld [vmem:[%s3 + $0x158] sm:$0xff]
      %v576 = vld [vmem:[%s3 + $0x160] sm:$0xff]
      %v577 = vld [vmem:[%s3 + $0x168] sm:$0xff]
      %v578 = vld [vmem:[%s3 + $0x170] sm:$0xff]
      %v579 = vld [vmem:[%s3 + $0x178] sm:$0xff]
      %v580 = vld [vmem:[%s3 + $0x180] sm:$0xff]
      %v581 = vld [vmem:[%s3 + $0x188] sm:$0xff]
      %v582 = vld [vmem:[%s3 + $0x190] sm:$0xff]
      %v583 = vld [vmem:[%s3 + $0x198] sm:$0xff]
      %v584 = vld [vmem:[%s3 + $0x1a0] sm:$0xff]
      %v585 = vld [vmem:[%s3 + $0x1a8] sm:$0xff]
      %v586 = vld [vmem:[%s3 + $0x1b0] sm:$0xff]
      %v587 = vld [vmem:[%s3 + $0x1b8] sm:$0xff]
      %v588 = vld [vmem:[%s3 + $0x1c0] sm:$0xff]
      %v589 = vld [vmem:[%s3 + $0x1c8] sm:$0xff]
      %v590 = vld [vmem:[%s3 + $0x1d0] sm:$0xff]
      %v591 = vld [vmem:[%s3 + $0x1d8] sm:$0xff]
      %v592 = vld [vmem:[%s3 + $0x1e0] sm:$0xff]
      %v593 = vld [vmem:[%s3 + $0x1e8] sm:$0xff]
      %v594 = vld [vmem:[%s3 + $0x1f0] sm:$0xff]
      %v595 = vld [vmem:[%s3 + $0x1f8] sm:$0xff]
      %596 = vmatprep.subr.mxu0 0.0
      %v597 = vand.u32 %v532, 4294901760
      %598 = vmatpush1.msra.mxu0 %v597
      %599 = vmatprep.subr.mxu0 0.0
      %v600 = vand.u32 %v533, 4294901760
      %601 = vmatpush1.msra.mxu0 %v600
      %602 = vmatprep.subr.mxu0 0.0
      %v603 = vand.u32 %v534, 4294901760
      %604 = vmatpush1.msra.mxu0 %v603
      %605 = vmatprep.subr.mxu0 0.0
      %v606 = vand.u32 %v535, 4294901760
      %607 = vmatpush1.msra.mxu0 %v606
      %608 = vmatprep.subr.mxu0 0.0
      %v609 = vand.u32 %v536, 4294901760
      %610 = vmatpush1.msra.mxu0 %v609
      %611 = vmatprep.subr.mxu0 0.0
      %v612 = vand.u32 %v537, 4294901760
      %613 = vmatpush1.msra.mxu0 %v612
      %614 = vmatprep.subr.mxu0 0.0
      %v615 = vand.u32 %v538, 4294901760
      %616 = vmatpush1.msra.mxu0 %v615
      %617 = vmatprep.subr.mxu0 0.0
      %v618 = vand.u32 %v539, 4294901760
      %619 = vmatpush1.msra.mxu0 %v618
      %620 = vmatprep.subr.mxu0 0.0
      %v621 = vand.u32 %v540, 4294901760
      %622 = vmatpush1.msra.mxu0 %v621
      %623 = vmatprep.subr.mxu0 0.0
      %v624 = vand.u32 %v541, 4294901760
      %625 = vmatpush1.msra.mxu0 %v624
      %626 = vmatprep.subr.mxu0 0.0
      %v627 = vand.u32 %v542, 4294901760
      %628 = vmatpush1.msra.mxu0 %v627
      %629 = vmatprep.subr.mxu0 0.0
      %v630 = vand.u32 %v543, 4294901760
      %631 = vmatpush1.msra.mxu0 %v630
      %632 = vmatprep.subr.mxu0 0.0
      %v633 = vand.u32 %v544, 4294901760
      %634 = vmatpush1.msra.mxu0 %v633
      %635 = vmatprep.subr.mxu0 0.0
      %v636 = vand.u32 %v545, 4294901760
      %637 = vmatpush1.msra.mxu0 %v636
      %638 = vmatprep.subr.mxu0 0.0
      %v639 = vand.u32 %v546, 4294901760
      %640 = vmatpush1.msra.mxu0 %v639
      %641 = vmatprep.subr.mxu0 0.0
      %v642 = vand.u32 %v547, 4294901760
      %643 = vmatpush1.msra.mxu0 %v642
      %644 = vmatprep.subr.mxu0 0.0
      %v645 = vand.u32 %v548, 4294901760
      %646 = vmatpush1.msra.mxu0 %v645
      %647 = vmatprep.subr.mxu0 0.0
      %v648 = vand.u32 %v549, 4294901760
      %649 = vmatpush1.msra.mxu0 %v648
      %650 = vmatprep.subr.mxu0 0.0
      %v651 = vand.u32 %v550, 4294901760
      %652 = vmatpush1.msra.mxu0 %v651
      %653 = vmatprep.subr.mxu0 0.0
      %v654 = vand.u32 %v551, 4294901760
      %655 = vmatpush1.msra.mxu0 %v654
      %656 = vmatprep.subr.mxu0 0.0
      %v657 = vand.u32 %v552, 4294901760
      %658 = vmatpush1.msra.mxu0 %v657
      %659 = vmatprep.subr.mxu0 0.0
      %v660 = vand.u32 %v553, 4294901760
      %661 = vmatpush1.msra.mxu0 %v660
      %662 = vmatprep.subr.mxu0 0.0
      %v663 = vand.u32 %v554, 4294901760
      %664 = vmatpush1.msra.mxu0 %v663
      %665 = vmatprep.subr.mxu0 0.0
      %v666 = vand.u32 %v555, 4294901760
      %667 = vmatpush1.msra.mxu0 %v666
      %668 = vmatprep.subr.mxu0 0.0
      %v669 = vand.u32 %v556, 4294901760
      %670 = vmatpush1.msra.mxu0 %v669
      %671 = vmatprep.subr.mxu0 0.0
      %v672 = vand.u32 %v557, 4294901760
      %673 = vmatpush1.msra.mxu0 %v672
      %674 = vmatprep.subr.mxu0 0.0
      %v675 = vand.u32 %v558, 4294901760
      %676 = vmatpush1.msra.mxu0 %v675
      %677 = vmatprep.subr.mxu0 0.0
      %v678 = vand.u32 %v559, 4294901760
      %679 = vmatpush1.msra.mxu0 %v678
      %680 = vmatprep.subr.mxu0 0.0
      %v681 = vand.u32 %v560, 4294901760
      %682 = vmatpush1.msra.mxu0 %v681
      %683 = vmatprep.subr.mxu0 0.0
      %v684 = vand.u32 %v561, 4294901760
      %685 = vmatpush1.msra.mxu0 %v684
      %686 = vmatprep.subr.mxu0 0.0
      %v687 = vand.u32 %v562, 4294901760
      %688 = vmatpush1.msra.mxu0 %v687
      %689 = vmatprep.subr.mxu0 0.0
      %v690 = vand.u32 %v563, 4294901760
      %691 = vmatpush1.msra.mxu0 %v690
      %v692 = vand.u32 %v501, 4294901760
      %v693 = vsub.f32 %v501, %v692
      %v694 = vand.u32 %v693, 4294901760
      %v695 = vsub.f32 %v693, %v694
      %v696 = vand.u32 %v695, 4294901760
      %697 = vmatprep.mubr.f32.mxu0 %v696
      %v698 = vand.u32 %v500, 4294901760
      %v699 = vsub.f32 %v500, %v698
      %v700 = vand.u32 %v699, 4294901760
      %v701 = vsub.f32 %v699, %v700
      %v702 = vand.u32 %v701, 4294901760
      %703 = vmatmul.mubr.f32.gmra.mrb[0].mxu0 %v702
      %v704 = vpop.f32.mrb[0].mxu0
      %v705 = vadd.f32 0.0, %v704
      %v706 = vpop.f32.mrb[0].mxu0
      %v707 = vand.u32 %v505, 4294901760
      %v708 = vsub.f32 %v505, %v707
      %v709 = vand.u32 %v708, 4294901760
      %v710 = vsub.f32 %v708, %v709
      %v711 = vand.u32 %v710, 4294901760
      %712 = vmatprep.mubr.f32.mxu0 %v711
      %v713 = vand.u32 %v504, 4294901760
      %v714 = vsub.f32 %v504, %v713
      %v715 = vand.u32 %v714, 4294901760
      %v716 = vsub.f32 %v714, %v715
      %v717 = vand.u32 %v716, 4294901760
      %718 = vmatmul.mubr.f32.gmra.mrb[0].mxu0 %v717
      %v719 = vpop.f32.mrb[0].mxu0
      %v720 = vadd.f32 0.0, %v719
      %v721 = vpop.f32.mrb[0].mxu0
      %v722 = vand.u32 %v509, 4294901760
      %v723 = vsub.f32 %v509, %v722
      %v724 = vand.u32 %v723, 4294901760
      %v725 = vsub.f32 %v723, %v724
      %v726 = vand.u32 %v725, 4294901760
      %727 = vmatprep.mubr.f32.mxu0 %v726
      %v728 = vand.u32 %v508, 4294901760
      %v729 = vsub.f32 %v508, %v728
      %v730 = vand.u32 %v729, 4294901760
      %v731 = vsub.f32 %v729, %v730
      %v732 = vand.u32 %v731, 4294901760
      %733 = vmatmul.mubr.f32.gmra.mrb[0].mxu0 %v732
      %v734 = vpop.f32.mrb[0].mxu0
      %v735 = vadd.f32 0.0, %v734
      %v736 = vpop.f32.mrb[0].mxu0
      %v737 = vand.u32 %v513, 4294901760
      %v738 = vsub.f32 %v513, %v737
      %v739 = vand.u32 %v738, 4294901760
      %v740 = vsub.f32 %v738, %v739
      %v741 = vand.u32 %v740, 4294901760
      %742 = vmatprep.mubr.f32.mxu0 %v741
      %v743 = vand.u32 %v512, 4294901760
      %v744 = vsub.f32 %v512, %v743
      %v745 = vand.u32 %v744, 4294901760
      %v746 = vsub.f32 %v744, %v745
      %v747 = vand.u32 %v746, 4294901760
      %748 = vmatmul.mubr.f32.gmra.mrb[0].mxu0 %v747
      %v749 = vpop.f32.mrb[0].mxu0
      %v750 = vadd.f32 0.0, %v749
      %v751 = vpop.f32.mrb[0].mxu0
      %v752 = vand.u32 %v517, 4294901760
      %v753 = vsub.f32 %v517, %v752
      %v754 = vand.u32 %v753, 4294901760
      %v755 = vsub.f32 %v753, %v754
      %v756 = vand.u32 %v755, 4294901760
      %757 = vmatprep.mubr.f32.mxu0 %v756
      %v758 = vand.u32 %v516, 4294901760
      %v759 = vsub.f32 %v516, %v758
      %v760 = vand.u32 %v759, 4294901760
      %v761 = vsub.f32 %v759, %v760
      %v762 = vand.u32 %v761, 4294901760
      %763 = vmatmul.mubr.f32.gmra.mrb[0].mxu0 %v762
      %v764 = vpop.f32.mrb[0].mxu0
      %v765 = vadd.f32 0.0, %v764
      %v766 = vpop.f32.mrb[0].mxu0
      %v767 = vand.u32 %v521, 4294901760
      %v768 = vsub.f32 %v521, %v767
      %v769 = vand.u32 %v768, 4294901760
      %v770 = vsub.f32 %v768, %v769
      %v771 = vand.u32 %v770, 4294901760
      %772 = vmatprep.mubr.f32.mxu0 %v771
      %v773 = vand.u32 %v520, 4294901760
      %v774 = vsub.f32 %v520, %v773
      %v775 = vand.u32 %v774, 4294901760
      %v776 = vsub.f32 %v774, %v775
      %v777 = vand.u32 %v776, 4294901760
      %778 = vmatmul.mubr.f32.gmra.mrb[0].mxu0 %v777
      %v779 = vpop.f32.mrb[0].mxu0
      %v780 = vadd.f32 0.0, %v779
      %v781 = vpop.f32.mrb[0].mxu0
      %v782 = vand.u32 %v525, 4294901760
      %v783 = vsub.f32 %v525, %v782
      %v784 = vand.u32 %v783, 4294901760
      %v785 = vsub.f32 %v783, %v784
      %v786 = vand.u32 %v785, 4294901760
      %787 = vmatprep.mubr.f32.mxu0 %v786
      %v788 = vand.u32 %v524, 4294901760
      %v789 = vsub.f32 %v524, %v788
      %v790 = vand.u32 %v789, 4294901760
      %v791 = vsub.f32 %v789, %v790
      %v792 = vand.u32 %v791, 4294901760
      %793 = vmatmul.mubr.f32.gmra.mrb[0].mxu0 %v792
      %v794 = vpop.f32.mrb[0].mxu0
      %v795 = vadd.f32 0.0, %v794
      %v796 = vpop.f32.mrb[0].mxu0
      %v797 = vand.u32 %v529, 4294901760
      %v798 = vsub.f32 %v529, %v797
      %v799 = vand.u32 %v798, 4294901760
      %v800 = vsub.f32 %v798, %v799
      %v801 = vand.u32 %v800, 4294901760
      %802 = vmatprep.mubr.f32.mxu0 %v801
      %v803 = vand.u32 %v528, 4294901760
      %v804 = vsub.f32 %v528, %v803
      %v805 = vand.u32 %v804, 4294901760
      %v806 = vsub.f32 %v804, %v805
      %v807 = vand.u32 %v806, 4294901760
      %808 = vmatmul.mubr.f32.gmra.mrb[0].mxu0 %v807
      %v809 = vpop.f32.mrb[0].mxu0
      %v810 = vadd.f32 0.0, %v809
      %v811 = vpop.f32.mrb[0].mxu0
      %812 = vdwg.mxu0
      %813 = vmatprep.subr.mxu0 0.0
      %v814 = vand.u32 %v532, 4294901760
      %v815 = vsub.f32 %v532, %v814
      %v816 = vand.u32 %v815, 4294901760
      %v817 = vsub.f32 %v815, %v816
      %v818 = vand.u32 %v817, 4294901760
      %819 = vmatpush1.msra.mxu0 %v818
      %820 = vmatprep.subr.mxu0 0.0
      %v821 = vand.u32 %v533, 4294901760
      %v822 = vsub.f32 %v533, %v821
      %v823 = vand.u32 %v822, 4294901760
      %v824 = vsub.f32 %v822, %v823
      %v825 = vand.u32 %v824, 4294901760
      %826 = vmatpush1.msra.mxu0 %v825
      %827 = vmatprep.subr.mxu0 0.0
      %v828 = vand.u32 %v534, 4294901760
      %v829 = vsub.f32 %v534, %v828
      %v830 = vand.u32 %v829, 4294901760
      %v831 = vsub.f32 %v829, %v830
      %v832 = vand.u32 %v831, 4294901760
      %833 = vmatpush1.msra.mxu0 %v832
      %834 = vmatprep.subr.mxu0 0.0
      %v835 = vand.u32 %v535, 4294901760
      %v836 = vsub.f32 %v535, %v835
      %v837 = vand.u32 %v836, 4294901760
      %v838 = vsub.f32 %v836, %v837
      %v839 = vand.u32 %v838, 4294901760
      %840 = vmatpush1.msra.mxu0 %v839
      %841 = vmatprep.subr.mxu0 0.0
      %v842 = vand.u32 %v536, 4294901760
      %v843 = vsub.f32 %v536, %v842
      %v844 = vand.u32 %v843, 4294901760
      %v845 = vsub.f32 %v843, %v844
      %v846 = vand.u32 %v845, 4294901760
      %847 = vmatpush1.msra.mxu0 %v846
      %848 = vmatprep.subr.mxu0 0.0
      %v849 = vand.u32 %v537, 4294901760
      %v850 = vsub.f32 %v537, %v849
      %v851 = vand.u32 %v850, 4294901760
      %v852 = vsub.f32 %v850, %v851
      %v853 = vand.u32 %v852, 4294901760
      %854 = vmatpush1.msra.mxu0 %v853
      %855 = vmatprep.subr.mxu0 0.0
      %v856 = vand.u32 %v538, 4294901760
      %v857 = vsub.f32 %v538, %v856
      %v858 = vand.u32 %v857, 4294901760
      %v859 = vsub.f32 %v857, %v858
      %v860 = vand.u32 %v859, 4294901760
      %861 = vmatpush1.msra.mxu0 %v860
      %862 = vmatprep.subr.mxu0 0.0
      %v863 = vand.u32 %v539, 4294901760
      %v864 = vsub.f32 %v539, %v863
      %v865 = vand.u32 %v864, 4294901760
      %v866 = vsub.f32 %v864, %v865
      %v867 = vand.u32 %v866, 4294901760
      %868 = vmatpush1.msra.mxu0 %v867
      %869 = vmatprep.subr.mxu0 0.0
      %v870 = vand.u32 %v540, 4294901760
      %v871 = vsub.f32 %v540, %v870
      %v872 = vand.u32 %v871, 4294901760
      %v873 = vsub.f32 %v871, %v872
      %v874 = vand.u32 %v873, 4294901760
      %875 = vmatpush1.msra.mxu0 %v874
      %876 = vmatprep.subr.mxu0 0.0
      %v877 = vand.u32 %v541, 4294901760
      %v878 = vsub.f32 %v541, %v877
      %v879 = vand.u32 %v878, 4294901760
      %v880 = vsub.f32 %v878, %v879
      %v881 = vand.u32 %v880, 4294901760
      %882 = vmatpush1.msra.mxu0 %v881
      %883 = vmatprep.subr.mxu0 0.0
      %v884 = vand.u32 %v542, 4294901760
      %v885 = vsub.f32 %v542, %v884
      %v886 = vand.u32 %v885, 4294901760
      %v887 = vsub.f32 %v885, %v886
      %v888 = vand.u32 %v887, 4294901760
      %889 = vmatpush1.msra.mxu0 %v888
      %890 = vmatprep.subr.mxu0 0.0
      %v891 = vand.u32 %v543, 4294901760
      %v892 = vsub.f32 %v543, %v891
      %v893 = vand.u32 %v892, 4294901760
      %v894 = vsub.f32 %v892, %v893
      %v895 = vand.u32 %v894, 4294901760
      %896 = vmatpush1.msra.mxu0 %v895
      %897 = vmatprep.subr.mxu0 0.0
      %v898 = vand.u32 %v544, 4294901760
      %v899 = vsub.f32 %v544, %v898
      %v900 = vand.u32 %v899, 4294901760
      %v901 = vsub.f32 %v899, %v900
      %v902 = vand.u32 %v901, 4294901760
      %903 = vmatpush1.msra.mxu0 %v902
      %904 = vmatprep.subr.mxu0 0.0
      %v905 = vand.u32 %v545, 4294901760
      %v906 = vsub.f32 %v545, %v905
      %v907 = vand.u32 %v906, 4294901760
      %v908 = vsub.f32 %v906, %v907
      %v909 = vand.u32 %v908, 4294901760
      %910 = vmatpush1.msra.mxu0 %v909
      %911 = vmatprep.subr.mxu0 0.0
      %v912 = vand.u32 %v546, 4294901760
      %v913 = vsub.f32 %v546, %v912
      %v914 = vand.u32 %v913, 4294901760
      %v915 = vsub.f32 %v913, %v914
      %v916 = vand.u32 %v915, 4294901760
      %917 = vmatpush1.msra.mxu0 %v916
      %918 = vmatprep.subr.mxu0 0.0
      %v919 = vand.u32 %v547, 4294901760
      %v920 = vsub.f32 %v547, %v919
      %v921 = vand.u32 %v920, 4294901760
      %v922 = vsub.f32 %v920, %v921
      %v923 = vand.u32 %v922, 4294901760
      %924 = vmatpush1.msra.mxu0 %v923
      %925 = vmatprep.subr.mxu0 0.0
      %v926 = vand.u32 %v548, 4294901760
      %v927 = vsub.f32 %v548, %v926
      %v928 = vand.u32 %v927, 4294901760
      %v929 = vsub.f32 %v927, %v928
      %v930 = vand.u32 %v929, 4294901760
      %931 = vmatpush1.msra.mxu0 %v930
      %932 = vmatprep.subr.mxu0 0.0
      %v933 = vand.u32 %v549, 4294901760
      %v934 = vsub.f32 %v549, %v933
      %v935 = vand.u32 %v934, 4294901760
      %v936 = vsub.f32 %v934, %v935
      %v937 = vand.u32 %v936, 4294901760
      %938 = vmatpush1.msra.mxu0 %v937
      %939 = vmatprep.subr.mxu0 0.0
      %v940 = vand.u32 %v550, 4294901760
      %v941 = vsub.f32 %v550, %v940
      %v942 = vand.u32 %v941, 4294901760
      %v943 = vsub.f32 %v941, %v942
      %v944 = vand.u32 %v943, 4294901760
      %945 = vmatpush1.msra.mxu0 %v944
      %946 = vmatprep.subr.mxu0 0.0
      %v947 = vand.u32 %v551, 4294901760
      %v948 = vsub.f32 %v551, %v947
      %v949 = vand.u32 %v948, 4294901760
      %v950 = vsub.f32 %v948, %v949
      %v951 = vand.u32 %v950, 4294901760
      %952 = vmatpush1.msra.mxu0 %v951
      %953 = vmatprep.subr.mxu0 0.0
      %v954 = vand.u32 %v552, 4294901760
      %v955 = vsub.f32 %v552, %v954
      %v956 = vand.u32 %v955, 4294901760
      %v957 = vsub.f32 %v955, %v956
      %v958 = vand.u32 %v957, 4294901760
      %959 = vmatpush1.msra.mxu0 %v958
      %960 = vmatprep.subr.mxu0 0.0
      %v961 = vand.u32 %v553, 4294901760
      %v962 = vsub.f32 %v553, %v961
      %v963 = vand.u32 %v962, 4294901760
      %v964 = vsub.f32 %v962, %v963
      %v965 = vand.u32 %v964, 4294901760
      %966 = vmatpush1.msra.mxu0 %v965
      %967 = vmatprep.subr.mxu0 0.0
      %v968 = vand.u32 %v554, 4294901760
      %v969 = vsub.f32 %v554, %v968
      %v970 = vand.u32 %v969, 4294901760
      %v971 = vsub.f32 %v969, %v970
      %v972 = vand.u32 %v971, 4294901760
      %973 = vmatpush1.msra.mxu0 %v972
      %974 = vmatprep.subr.mxu0 0.0
      %v975 = vand.u32 %v555, 4294901760
      %v976 = vsub.f32 %v555, %v975
      %v977 = vand.u32 %v976, 4294901760
      %v978 = vsub.f32 %v976, %v977
      %v979 = vand.u32 %v978, 4294901760
      %980 = vmatpush1.msra.mxu0 %v979
      %981 = vmatprep.subr.mxu0 0.0
      %v982 = vand.u32 %v556, 4294901760
      %v983 = vsub.f32 %v556, %v982
      %v984 = vand.u32 %v983, 4294901760
      %v985 = vsub.f32 %v983, %v984
      %v986 = vand.u32 %v985, 4294901760
      %987 = vmatpush1.msra.mxu0 %v986
      %988 = vmatprep.subr.mxu0 0.0
      %v989 = vand.u32 %v557, 4294901760
      %v990 = vsub.f32 %v557, %v989
      %v991 = vand.u32 %v990, 4294901760
      %v992 = vsub.f32 %v990, %v991
      %v993 = vand.u32 %v992, 4294901760
      %994 = vmatpush1.msra.mxu0 %v993
      %995 = vmatprep.subr.mxu0 0.0
      %v996 = vand.u32 %v558, 4294901760
      %v997 = vsub.f32 %v558, %v996
      %v998 = vand.u32 %v997, 4294901760
      %v999 = vsub.f32 %v997, %v998
      %v1000 = vand.u32 %v999, 4294901760
      %1001 = vmatpush1.msra.mxu0 %v1000
      %1002 = vmatprep.subr.mxu0 0.0
      %v1003 = vand.u32 %v559, 4294901760
      %v1004 = vsub.f32 %v559, %v1003
      %v1005 = vand.u32 %v1004, 4294901760
      %v1006 = vsub.f32 %v1004, %v1005
      %v1007 = vand.u32 %v1006, 4294901760
      %1008 = vmatpush1.msra.mxu0 %v1007
      %1009 = vmatprep.subr.mxu0 0.0
      %v1010 = vand.u32 %v560, 4294901760
      %v1011 = vsub.f32 %v560, %v1010
      %v1012 = vand.u32 %v1011, 4294901760
      %v1013 = vsub.f32 %v1011, %v1012
      %v1014 = vand.u32 %v1013, 4294901760
      %1015 = vmatpush1.msra.mxu0 %v1014
      %1016 = vmatprep.subr.mxu0 0.0
      %v1017 = vand.u32 %v561, 4294901760
      %v1018 = vsub.f32 %v561, %v1017
      %v1019 = vand.u32 %v1018, 4294901760
      %v1020 = vsub.f32 %v1018, %v1019
      %v1021 = vand.u32 %v1020, 4294901760
      %1022 = vmatpush1.msra.mxu0 %v1021
      %1023 = vmatprep.subr.mxu0 0.0
      %v1024 = vand.u32 %v562, 4294901760
      %v1025 = vsub.f32 %v562, %v1024
      %v1026 = vand.u32 %v1025, 4294901760
      %v1027 = vsub.f32 %v1025, %v1026
      %v1028 = vand.u32 %v1027, 4294901760
      %1029 = vmatpush1.msra.mxu0 %v1028
      %1030 = vmatprep.subr.mxu0 0.0
      %v1031 = vand.u32 %v563, 4294901760
      %v1032 = vsub.f32 %v563, %v1031
      %v1033 = vand.u32 %v1032, 4294901760
      %v1034 = vsub.f32 %v1032, %v1033
      %v1035 = vand.u32 %v1034, 4294901760
      %1036 = vmatpush1.msra.mxu0 %v1035
      %v1037 = vand.u32 %v501, 4294901760
      %1038 = vmatprep.mubr.f32.mxu0 %v1037
      %v1039 = vand.u32 %v500, 4294901760
      %1040 = vmatmul.mubr.f32.gmra.mrb[0].mxu0 %v1039
      %v1041 = vpop.f32.mrb[0].mxu0
      %v1042 = vadd.f32 %v705, %v1041
      %v1043 = vpop.f32.mrb[0].mxu0
      %v1044 = vand.u32 %v505, 4294901760
      %1045 = vmatprep.mubr.f32.mxu0 %v1044
      %v1046 = vand.u32 %v504, 4294901760
      %1047 = vmatmul.mubr.f32.gmra.mrb[0].mxu0 %v1046
      %v1048 = vpop.f32.mrb[0].mxu0
      %v1049 = vadd.f32 %v720, %v1048
      %v1050 = vpop.f32.mrb[0].mxu0
      %v1051 = vand.u32 %v509, 4294901760
      %1052 = vmatprep.mubr.f32.mxu0 %v1051
      %v1053 = vand.u32 %v508, 4294901760
      %1054 = vmatmul.mubr.f32.gmra.mrb[0].mxu0 %v1053
      %v1055 = vpop.f32.mrb[0].mxu0
      %v1056 = vadd.f32 %v735, %v1055
      %v1057 = vpop.f32.mrb[0].mxu0
      %v1058 = vand.u32 %v513, 4294901760
      %1059 = vmatprep.mubr.f32.mxu0 %v1058
      %v1060 = vand.u32 %v512, 4294901760
      %1061 = vmatmul.mubr.f32.gmra.mrb[0].mxu0 %v1060
      %v1062 = vpop.f32.mrb[0].mxu0
      %v1063 = vadd.f32 %v750, %v1062
      %v1064 = vpop.f32.mrb[0].mxu0
      %v1065 = vand.u32 %v517, 4294901760
      %1066 = vmatprep.mubr.f32.mxu0 %v1065
      %v1067 = vand.u32 %v516, 4294901760
      %1068 = vmatmul.mubr.f32.gmra.mrb[0].mxu0 %v1067
      %v1069 = vpop.f32.mrb[0].mxu0
      %v1070 = vadd.f32 %v765, %v1069
      %v1071 = vpop.f32.mrb[0].mxu0
      %v1072 = vand.u32 %v521, 4294901760
      %1073 = vmatprep.mubr.f32.mxu0 %v1072
      %v1074 = vand.u32 %v520, 4294901760
      %1075 = vmatmul.mubr.f32.gmra.mrb[0].mxu0 %v1074
      %v1076 = vpop.f32.mrb[0].mxu0
      %v1077 = vadd.f32 %v780, %v1076
      %v1078 = vpop.f32.mrb[0].mxu0
      %v1079 = vand.u32 %v525, 4294901760
      %1080 = vmatprep.mubr.f32.mxu0 %v1079
      %v1081 = vand.u32 %v524, 4294901760
      %1082 = vmatmul.mubr.f32.gmra.mrb[0].mxu0 %v1081
      %v1083 = vpop.f32.mrb[0].mxu0
      %v1084 = vadd.f32 %v795, %v1083
      %v1085 = vpop.f32.mrb[0].mxu0
      %v1086 = vand.u32 %v529, 4294901760
      %1087 = vmatprep.mubr.f32.mxu0 %v1086
      %v1088 = vand.u32 %v528, 4294901760
      %1089 = vmatmul.mubr.f32.gmra.mrb[0].mxu0 %v1088
      %v1090 = vpop.f32.mrb[0].mxu0
      %v1091 = vadd.f32 %v810, %v1090
      %v1092 = vpop.f32.mrb[0].mxu0
      %1093 = vdwg.mxu0
      %1094 = vmatprep.subr.mxu0 0.0
      %v1095 = vand.u32 %v532, 4294901760
      %v1096 = vsub.f32 %v532, %v1095
      %1097 = vmatpush1.msra.mxu0 %v1096
      %1098 = vmatprep.subr.mxu0 0.0
      %v1099 = vand.u32 %v533, 4294901760
      %v1100 = vsub.f32 %v533, %v1099
      %1101 = vmatpush1.msra.mxu0 %v1100
      %1102 = vmatprep.subr.mxu0 0.0
      %v1103 = vand.u32 %v534, 4294901760
      %v1104 = vsub.f32 %v534, %v1103
      %1105 = vmatpush1.msra.mxu0 %v1104
      %1106 = vmatprep.subr.mxu0 0.0
      %v1107 = vand.u32 %v535, 4294901760
      %v1108 = vsub.f32 %v535, %v1107
      %1109 = vmatpush1.msra.mxu0 %v1108
      %1110 = vmatprep.subr.mxu0 0.0
      %v1111 = vand.u32 %v536, 4294901760
      %v1112 = vsub.f32 %v536, %v1111
      %1113 = vmatpush1.msra.mxu0 %v1112
      %1114 = vmatprep.subr.mxu0 0.0
      %v1115 = vand.u32 %v537, 4294901760
      %v1116 = vsub.f32 %v537, %v1115
      %1117 = vmatpush1.msra.mxu0 %v1116
      %1118 = vmatprep.subr.mxu0 0.0
      %v1119 = vand.u32 %v538, 4294901760
      %v1120 = vsub.f32 %v538, %v1119
      %1121 = vmatpush1.msra.mxu0 %v1120
      %1122 = vmatprep.subr.mxu0 0.0
      %v1123 = vand.u32 %v539, 4294901760
      %v1124 = vsub.f32 %v539, %v1123
      %1125 = vmatpush1.msra.mxu0 %v1124
      %1126 = vmatprep.subr.mxu0 0.0
      %v1127 = vand.u32 %v540, 4294901760
      %v1128 = vsub.f32 %v540, %v1127
      %1129 = vmatpush1.msra.mxu0 %v1128
      %1130 = vmatprep.subr.mxu0 0.0
      %v1131 = vand.u32 %v541, 4294901760
      %v1132 = vsub.f32 %v541, %v1131
      %1133 = vmatpush1.msra.mxu0 %v1132
      %1134 = vmatprep.subr.mxu0 0.0
      %v1135 = vand.u32 %v542, 4294901760
      %v1136 = vsub.f32 %v542, %v1135
      %1137 = vmatpush1.msra.mxu0 %v1136
      %1138 = vmatprep.subr.mxu0 0.0
      %v1139 = vand.u32 %v543, 4294901760
      %v1140 = vsub.f32 %v543, %v1139
      %1141 = vmatpush1.msra.mxu0 %v1140
      %1142 = vmatprep.subr.mxu0 0.0
      %v1143 = vand.u32 %v544, 4294901760
      %v1144 = vsub.f32 %v544, %v1143
      %1145 = vmatpush1.msra.mxu0 %v1144
      %1146 = vmatprep.subr.mxu0 0.0
      %v1147 = vand.u32 %v545, 4294901760
      %v1148 = vsub.f32 %v545, %v1147
      %1149 = vmatpush1.msra.mxu0 %v1148
      %1150 = vmatprep.subr.mxu0 0.0
      %v1151 = vand.u32 %v546, 4294901760
      %v1152 = vsub.f32 %v546, %v1151
      %1153 = vmatpush1.msra.mxu0 %v1152
      %1154 = vmatprep.subr.mxu0 0.0
      %v1155 = vand.u32 %v547, 4294901760
      %v1156 = vsub.f32 %v547, %v1155
      %1157 = vmatpush1.msra.mxu0 %v1156
      %1158 = vmatprep.subr.mxu0 0.0
      %v1159 = vand.u32 %v548, 4294901760
      %v1160 = vsub.f32 %v548, %v1159
      %1161 = vmatpush1.msra.mxu0 %v1160
      %1162 = vmatprep.subr.mxu0 0.0
      %v1163 = vand.u32 %v549, 4294901760
      %v1164 = vsub.f32 %v549, %v1163
      %1165 = vmatpush1.msra.mxu0 %v1164
      %1166 = vmatprep.subr.mxu0 0.0
      %v1167 = vand.u32 %v550, 4294901760
      %v1168 = vsub.f32 %v550, %v1167
      %1169 = vmatpush1.msra.mxu0 %v1168
      %1170 = vmatprep.subr.mxu0 0.0
      %v1171 = vand.u32 %v551, 4294901760
      %v1172 = vsub.f32 %v551, %v1171
      %1173 = vmatpush1.msra.mxu0 %v1172
      %1174 = vmatprep.subr.mxu0 0.0
      %v1175 = vand.u32 %v552, 4294901760
      %v1176 = vsub.f32 %v552, %v1175
      %1177 = vmatpush1.msra.mxu0 %v1176
      %1178 = vmatprep.subr.mxu0 0.0
      %v1179 = vand.u32 %v553, 4294901760
      %v1180 = vsub.f32 %v553, %v1179
      %1181 = vmatpush1.msra.mxu0 %v1180
      %1182 = vmatprep.subr.mxu0 0.0
      %v1183 = vand.u32 %v554, 4294901760
      %v1184 = vsub.f32 %v554, %v1183
      %1185 = vmatpush1.msra.mxu0 %v1184
      %1186 = vmatprep.subr.mxu0 0.0
      %v1187 = vand.u32 %v555, 4294901760
      %v1188 = vsub.f32 %v555, %v1187
      %1189 = vmatpush1.msra.mxu0 %v1188
      %1190 = vmatprep.subr.mxu0 0.0
      %v1191 = vand.u32 %v556, 4294901760
      %v1192 = vsub.f32 %v556, %v1191
      %1193 = vmatpush1.msra.mxu0 %v1192
      %1194 = vmatprep.subr.mxu0 0.0
      %v1195 = vand.u32 %v557, 4294901760
      %v1196 = vsub.f32 %v557, %v1195
      %1197 = vmatpush1.msra.mxu0 %v1196
      %1198 = vmatprep.subr.mxu0 0.0
      %v1199 = vand.u32 %v558, 4294901760
      %v1200 = vsub.f32 %v558, %v1199
      %1201 = vmatpush1.msra.mxu0 %v1200
      %1202 = vmatprep.subr.mxu0 0.0
      %v1203 = vand.u32 %v559, 4294901760
      %v1204 = vsub.f32 %v559, %v1203
      %1205 = vmatpush1.msra.mxu0 %v1204
      %1206 = vmatprep.subr.mxu0 0.0
      %v1207 = vand.u32 %v560, 4294901760
      %v1208 = vsub.f32 %v560, %v1207
      %1209 = vmatpush1.msra.mxu0 %v1208
      %1210 = vmatprep.subr.mxu0 0.0
      %v1211 = vand.u32 %v561, 4294901760
      %v1212 = vsub.f32 %v561, %v1211
      %1213 = vmatpush1.msra.mxu0 %v1212
      %1214 = vmatprep.subr.mxu0 0.0
      %v1215 = vand.u32 %v562, 4294901760
      %v1216 = vsub.f32 %v562, %v1215
      %1217 = vmatpush1.msra.mxu0 %v1216
      %1218 = vmatprep.subr.mxu0 0.0
      %v1219 = vand.u32 %v563, 4294901760
      %v1220 = vsub.f32 %v563, %v1219
      %1221 = vmatpush1.msra.mxu0 %v1220
      %v1222 = vand.u32 %v501, 4294901760
      %v1223 = vsub.f32 %v501, %v1222
      %1224 = vmatprep.mubr.f32.mxu0 %v1223
      %v1225 = vand.u32 %v500, 4294901760
      %v1226 = vsub.f32 %v500, %v1225
      %1227 = vmatmul.mubr.f32.gmra.mrb[0].mxu0 %v1226
      %v1228 = vpop.f32.mrb[0].mxu0
      %v1229 = vadd.f32 %v1042, %v1228
      %v1230 = vpop.f32.mrb[0].mxu0
      %v1231 = vand.u32 %v505, 4294901760
      %v1232 = vsub.f32 %v505, %v1231
      %1233 = vmatprep.mubr.f32.mxu0 %v1232
      %v1234 = vand.u32 %v504, 4294901760
      %v1235 = vsub.f32 %v504, %v1234
      %1236 = vmatmul.mubr.f32.gmra.mrb[0].mxu0 %v1235
      %v1237 = vpop.f32.mrb[0].mxu0
      %v1238 = vadd.f32 %v1049, %v1237
      %v1239 = vpop.f32.mrb[0].mxu0
      %v1240 = vand.u32 %v509, 4294901760
      %v1241 = vsub.f32 %v509, %v1240
      %1242 = vmatprep.mubr.f32.mxu0 %v1241
      %v1243 = vand.u32 %v508, 4294901760
      %v1244 = vsub.f32 %v508, %v1243
      %1245 = vmatmul.mubr.f32.gmra.mrb[0].mxu0 %v1244
      %v1246 = vpop.f32.mrb[0].mxu0
      %v1247 = vadd.f32 %v1056, %v1246
      %v1248 = vpop.f32.mrb[0].mxu0
      %v1249 = vand.u32 %v513, 4294901760
      %v1250 = vsub.f32 %v513, %v1249
      %1251 = vmatprep.mubr.f32.mxu0 %v1250
      %v1252 = vand.u32 %v512, 4294901760
      %v1253 = vsub.f32 %v512, %v1252
      %1254 = vmatmul.mubr.f32.gmra.mrb[0].mxu0 %v1253
      %v1255 = vpop.f32.mrb[0].mxu0
      %v1256 = vadd.f32 %v1063, %v1255
      %v1257 = vpop.f32.mrb[0].mxu0
      %v1258 = vand.u32 %v517, 4294901760
      %v1259 = vsub.f32 %v517, %v1258
      %1260 = vmatprep.mubr.f32.mxu0 %v1259
      %v1261 = vand.u32 %v516, 4294901760
      %v1262 = vsub.f32 %v516, %v1261
      %1263 = vmatmul.mubr.f32.gmra.mrb[0].mxu0 %v1262
      %v1264 = vpop.f32.mrb[0].mxu0
      %v1265 = vadd.f32 %v1070, %v1264
      %v1266 = vpop.f32.mrb[0].mxu0
      %v1267 = vand.u32 %v521, 4294901760
      %v1268 = vsub.f32 %v521, %v1267
      %1269 = vmatprep.mubr.f32.mxu0 %v1268
      %v1270 = vand.u32 %v520, 4294901760
      %v1271 = vsub.f32 %v520, %v1270
      %1272 = vmatmul.mubr.f32.gmra.mrb[0].mxu0 %v1271
      %v1273 = vpop.f32.mrb[0].mxu0
      %v1274 = vadd.f32 %v1077, %v1273
      %v1275 = vpop.f32.mrb[0].mxu0
      %v1276 = vand.u32 %v525, 4294901760
      %v1277 = vsub.f32 %v525, %v1276
      %1278 = vmatprep.mubr.f32.mxu0 %v1277
      %v1279 = vand.u32 %v524, 4294901760
      %v1280 = vsub.f32 %v524, %v1279
      %1281 = vmatmul.mubr.f32.gmra.mrb[0].mxu0 %v1280
      %v1282 = vpop.f32.mrb[0].mxu0
      %v1283 = vadd.f32 %v1084, %v1282
      %v1284 = vpop.f32.mrb[0].mxu0
      %v1285 = vand.u32 %v529, 4294901760
      %v1286 = vsub.f32 %v529, %v1285
      %1287 = vmatprep.mubr.f32.mxu0 %v1286
      %v1288 = vand.u32 %v528, 4294901760
      %v1289 = vsub.f32 %v528, %v1288
      %1290 = vmatmul.mubr.f32.gmra.mrb[0].mxu0 %v1289
      %v1291 = vpop.f32.mrb[0].mxu0
      %v1292 = vadd.f32 %v1091, %v1291
      %v1293 = vpop.f32.mrb[0].mxu0
      %1294 = vdwg.mxu0
      %1295 = vmatprep.subr.mxu0 0.0
      %v1296 = vand.u32 %v532, 4294901760
      %1297 = vmatpush1.msra.mxu0 %v1296
      %1298 = vmatprep.subr.mxu0 0.0
      %v1299 = vand.u32 %v533, 4294901760
      %1300 = vmatpush1.msra.mxu0 %v1299
      %1301 = vmatprep.subr.mxu0 0.0
      %v1302 = vand.u32 %v534, 4294901760
      %1303 = vmatpush1.msra.mxu0 %v1302
      %1304 = vmatprep.subr.mxu0 0.0
      %v1305 = vand.u32 %v535, 4294901760
      %1306 = vmatpush1.msra.mxu0 %v1305
      %1307 = vmatprep.subr.mxu0 0.0
      %v1308 = vand.u32 %v536, 4294901760
      %1309 = vmatpush1.msra.mxu0 %v1308
      %1310 = vmatprep.subr.mxu0 0.0
      %v1311 = vand.u32 %v537, 4294901760
      %1312 = vmatpush1.msra.mxu0 %v1311
      %1313 = vmatprep.subr.mxu0 0.0
      %v1314 = vand.u32 %v538, 4294901760
      %1315 = vmatpush1.msra.mxu0 %v1314
      %1316 = vmatprep.subr.mxu0 0.0
      %v1317 = vand.u32 %v539, 4294901760
      %1318 = vmatpush1.msra.mxu0 %v1317
      %1319 = vmatprep.subr.mxu0 0.0
      %v1320 = vand.u32 %v540, 4294901760
      %1321 = vmatpush1.msra.mxu0 %v1320
      %1322 = vmatprep.subr.mxu0 0.0
      %v1323 = vand.u32 %v541, 4294901760
      %1324 = vmatpush1.msra.mxu0 %v1323
      %1325 = vmatprep.subr.mxu0 0.0
      %v1326 = vand.u32 %v542, 4294901760
      %1327 = vmatpush1.msra.mxu0 %v1326
      %1328 = vmatprep.subr.mxu0 0.0
      %v1329 = vand.u32 %v543, 4294901760
      %1330 = vmatpush1.msra.mxu0 %v1329
      %1331 = vmatprep.subr.mxu0 0.0
      %v1332 = vand.u32 %v544, 4294901760
      %1333 = vmatpush1.msra.mxu0 %v1332
      %1334 = vmatprep.subr.mxu0 0.0
      %v1335 = vand.u32 %v545, 4294901760
      %1336 = vmatpush1.msra.mxu0 %v1335
      %1337 = vmatprep.subr.mxu0 0.0
      %v1338 = vand.u32 %v546, 4294901760
      %1339 = vmatpush1.msra.mxu0 %v1338
      %1340 = vmatprep.subr.mxu0 0.0
      %v1341 = vand.u32 %v547, 4294901760
      %1342 = vmatpush1.msra.mxu0 %v1341
      %1343 = vmatprep.subr.mxu0 0.0
      %v1344 = vand.u32 %v548, 4294901760
      %1345 = vmatpush1.msra.mxu0 %v1344
      %1346 = vmatprep.subr.mxu0 0.0
      %v1347 = vand.u32 %v549, 4294901760
      %1348 = vmatpush1.msra.mxu0 %v1347
      %1349 = vmatprep.subr.mxu0 0.0
      %v1350 = vand.u32 %v550, 4294901760
      %1351 = vmatpush1.msra.mxu0 %v1350
      %1352 = vmatprep.subr.mxu0 0.0
      %v1353 = vand.u32 %v551, 4294901760
      %1354 = vmatpush1.msra.mxu0 %v1353
      %1355 = vmatprep.subr.mxu0 0.0
      %v1356 = vand.u32 %v552, 4294901760
      %1357 = vmatpush1.msra.mxu0 %v1356
      %1358 = vmatprep.subr.mxu0 0.0
      %v1359 = vand.u32 %v553, 4294901760
      %1360 = vmatpush1.msra.mxu0 %v1359
      %1361 = vmatprep.subr.mxu0 0.0
      %v1362 = vand.u32 %v554, 4294901760
      %1363 = vmatpush1.msra.mxu0 %v1362
      %1364 = vmatprep.subr.mxu0 0.0
      %v1365 = vand.u32 %v555, 4294901760
      %1366 = vmatpush1.msra.mxu0 %v1365
      %1367 = vmatprep.subr.mxu0 0.0
      %v1368 = vand.u32 %v556, 4294901760
      %1369 = vmatpush1.msra.mxu0 %v1368
      %1370 = vmatprep.subr.mxu0 0.0
      %v1371 = vand.u32 %v557, 4294901760
      %1372 = vmatpush1.msra.mxu0 %v1371
      %1373 = vmatprep.subr.mxu0 0.0
      %v1374 = vand.u32 %v558, 4294901760
      %1375 = vmatpush1.msra.mxu0 %v1374
      %1376 = vmatprep.subr.mxu0 0.0
      %v1377 = vand.u32 %v559, 4294901760
      %1378 = vmatpush1.msra.mxu0 %v1377
      %1379 = vmatprep.subr.mxu0 0.0
      %v1380 = vand.u32 %v560, 4294901760
      %1381 = vmatpush1.msra.mxu0 %v1380
      %1382 = vmatprep.subr.mxu0 0.0
      %v1383 = vand.u32 %v561, 4294901760
      %1384 = vmatpush1.msra.mxu0 %v1383
      %1385 = vmatprep.subr.mxu0 0.0
      %v1386 = vand.u32 %v562, 4294901760
      %1387 = vmatpush1.msra.mxu0 %v1386
      %1388 = vmatprep.subr.mxu0 0.0
      %v1389 = vand.u32 %v563, 4294901760
      %1390 = vmatpush1.msra.mxu0 %v1389
      %v1391 = vand.u32 %v501, 4294901760
      %v1392 = vsub.f32 %v501, %v1391
      %v1393 = vand.u32 %v1392, 4294901760
      %1394 = vmatprep.mubr.f32.mxu0 %v1393
      %v1395 = vand.u32 %v500, 4294901760
      %v1396 = vsub.f32 %v500, %v1395
      %v1397 = vand.u32 %v1396, 4294901760
      %1398 = vmatmul.mubr.f32.gmra.mrb[0].mxu0 %v1397
      %v1399 = vpop.f32.mrb[0].mxu0
      %v1400 = vadd.f32 %v1229, %v1399
      %v1401 = vpop.f32.mrb[0].mxu0
      %v1402 = vand.u32 %v505, 4294901760
      %v1403 = vsub.f32 %v505, %v1402
      %v1404 = vand.u32 %v1403, 4294901760
      %1405 = vmatprep.mubr.f32.mxu0 %v1404
      %v1406 = vand.u32 %v504, 4294901760
      %v1407 = vsub.f32 %v504, %v1406
      %v1408 = vand.u32 %v1407, 4294901760
      %1409 = vmatmul.mubr.f32.gmra.mrb[0].mxu0 %v1408
      %v1410 = vpop.f32.mrb[0].mxu0
      %v1411 = vadd.f32 %v1238, %v1410
      %v1412 = vpop.f32.mrb[0].mxu0
      %v1413 = vand.u32 %v509, 4294901760
      %v1414 = vsub.f32 %v509, %v1413
      %v1415 = vand.u32 %v1414, 4294901760
      %1416 = vmatprep.mubr.f32.mxu0 %v1415
      %v1417 = vand.u32 %v508, 4294901760
      %v1418 = vsub.f32 %v508, %v1417
      %v1419 = vand.u32 %v1418, 4294901760
      %1420 = vmatmul.mubr.f32.gmra.mrb[0].mxu0 %v1419
      %v1421 = vpop.f32.mrb[0].mxu0
      %v1422 = vadd.f32 %v1247, %v1421
      %v1423 = vpop.f32.mrb[0].mxu0
      %v1424 = vand.u32 %v513, 4294901760
      %v1425 = vsub.f32 %v513, %v1424
      %v1426 = vand.u32 %v1425, 4294901760
      %1427 = vmatprep.mubr.f32.mxu0 %v1426
      %v1428 = vand.u32 %v512, 4294901760
      %v1429 = vsub.f32 %v512, %v1428
      %v1430 = vand.u32 %v1429, 4294901760
      %1431 = vmatmul.mubr.f32.gmra.mrb[0].mxu0 %v1430
      %v1432 = vpop.f32.mrb[0].mxu0
      %v1433 = vadd.f32 %v1256, %v1432
      %v1434 = vpop.f32.mrb[0].mxu0
      %v1435 = vand.u32 %v517, 4294901760
      %v1436 = vsub.f32 %v517, %v1435
      %v1437 = vand.u32 %v1436, 4294901760
      %1438 = vmatprep.mubr.f32.mxu0 %v1437
      %v1439 = vand.u32 %v516, 4294901760
      %v1440 = vsub.f32 %v516, %v1439
      %v1441 = vand.u32 %v1440, 4294901760
      %1442 = vmatmul.mubr.f32.gmra.mrb[0].mxu0 %v1441
      %v1443 = vpop.f32.mrb[0].mxu0
      %v1444 = vadd.f32 %v1265, %v1443
      %v1445 = vpop.f32.mrb[0].mxu0
      %v1446 = vand.u32 %v521, 4294901760
      %v1447 = vsub.f32 %v521, %v1446
      %v1448 = vand.u32 %v1447, 4294901760
      %1449 = vmatprep.mubr.f32.mxu0 %v1448
      %v1450 = vand.u32 %v520, 4294901760
      %v1451 = vsub.f32 %v520, %v1450
      %v1452 = vand.u32 %v1451, 4294901760
      %1453 = vmatmul.mubr.f32.gmra.mrb[0].mxu0 %v1452
      %v1454 = vpop.f32.mrb[0].mxu0
      %v1455 = vadd.f32 %v1274, %v1454
      %v1456 = vpop.f32.mrb[0].mxu0
      %v1457 = vand.u32 %v525, 4294901760
      %v1458 = vsub.f32 %v525, %v1457
      %v1459 = vand.u32 %v1458, 4294901760
      %1460 = vmatprep.mubr.f32.mxu0 %v1459
      %v1461 = vand.u32 %v524, 4294901760
      %v1462 = vsub.f32 %v524, %v1461
      %v1463 = vand.u32 %v1462, 4294901760
      %1464 = vmatmul.mubr.f32.gmra.mrb[0].mxu0 %v1463
      %v1465 = vpop.f32.mrb[0].mxu0
      %v1466 = vadd.f32 %v1283, %v1465
      %v1467 = vpop.f32.mrb[0].mxu0
      %v1468 = vand.u32 %v529, 4294901760
      %v1469 = vsub.f32 %v529, %v1468
      %v1470 = vand.u32 %v1469, 4294901760
      %1471 = vmatprep.mubr.f32.mxu0 %v1470
      %v1472 = vand.u32 %v528, 4294901760
      %v1473 = vsub.f32 %v528, %v1472
      %v1474 = vand.u32 %v1473, 4294901760
      %1475 = vmatmul.mubr.f32.gmra.mrb[0].mxu0 %v1474
      %v1476 = vpop.f32.mrb[0].mxu0
      %v1477 = vadd.f32 %v1292, %v1476
      %v1478 = vpop.f32.mrb[0].mxu0
      %1479 = vdwg.mxu0
      %1480 = vmatprep.subr.mxu0 0.0
      %v1481 = vand.u32 %v532, 4294901760
      %v1482 = vsub.f32 %v532, %v1481
      %v1483 = vand.u32 %v1482, 4294901760
      %1484 = vmatpush1.msra.mxu0 %v1483
      %1485 = vmatprep.subr.mxu0 0.0
      %v1486 = vand.u32 %v533, 4294901760
      %v1487 = vsub.f32 %v533, %v1486
      %v1488 = vand.u32 %v1487, 4294901760
      %1489 = vmatpush1.msra.mxu0 %v1488
      %1490 = vmatprep.subr.mxu0 0.0
      %v1491 = vand.u32 %v534, 4294901760
      %v1492 = vsub.f32 %v534, %v1491
      %v1493 = vand.u32 %v1492, 4294901760
      %1494 = vmatpush1.msra.mxu0 %v1493
      %1495 = vmatprep.subr.mxu0 0.0
      %v1496 = vand.u32 %v535, 4294901760
      %v1497 = vsub.f32 %v535, %v1496
      %v1498 = vand.u32 %v1497, 4294901760
      %1499 = vmatpush1.msra.mxu0 %v1498
      %1500 = vmatprep.subr.mxu0 0.0
      %v1501 = vand.u32 %v536, 4294901760
      %v1502 = vsub.f32 %v536, %v1501
      %v1503 = vand.u32 %v1502, 4294901760
      %1504 = vmatpush1.msra.mxu0 %v1503
      %1505 = vmatprep.subr.mxu0 0.0
      %v1506 = vand.u32 %v537, 4294901760
      %v1507 = vsub.f32 %v537, %v1506
      %v1508 = vand.u32 %v1507, 4294901760
      %1509 = vmatpush1.msra.mxu0 %v1508
      %1510 = vmatprep.subr.mxu0 0.0
      %v1511 = vand.u32 %v538, 4294901760
      %v1512 = vsub.f32 %v538, %v1511
      %v1513 = vand.u32 %v1512, 4294901760
      %1514 = vmatpush1.msra.mxu0 %v1513
      %1515 = vmatprep.subr.mxu0 0.0
      %v1516 = vand.u32 %v539, 4294901760
      %v1517 = vsub.f32 %v539, %v1516
      %v1518 = vand.u32 %v1517, 4294901760
      %1519 = vmatpush1.msra.mxu0 %v1518
      %1520 = vmatprep.subr.mxu0 0.0
      %v1521 = vand.u32 %v540, 4294901760
      %v1522 = vsub.f32 %v540, %v1521
      %v1523 = vand.u32 %v1522, 4294901760
      %1524 = vmatpush1.msra.mxu0 %v1523
      %1525 = vmatprep.subr.mxu0 0.0
      %v1526 = vand.u32 %v541, 4294901760
      %v1527 = vsub.f32 %v541, %v1526
      %v1528 = vand.u32 %v1527, 4294901760
      %1529 = vmatpush1.msra.mxu0 %v1528
      %1530 = vmatprep.subr.mxu0 0.0
      %v1531 = vand.u32 %v542, 4294901760
      %v1532 = vsub.f32 %v542, %v1531
      %v1533 = vand.u32 %v1532, 4294901760
      %1534 = vmatpush1.msra.mxu0 %v1533
      %1535 = vmatprep.subr.mxu0 0.0
      %v1536 = vand.u32 %v543, 4294901760
      %v1537 = vsub.f32 %v543, %v1536
      %v1538 = vand.u32 %v1537, 4294901760
      %1539 = vmatpush1.msra.mxu0 %v1538
      %1540 = vmatprep.subr.mxu0 0.0
      %v1541 = vand.u32 %v544, 4294901760
      %v1542 = vsub.f32 %v544, %v1541
      %v1543 = vand.u32 %v1542, 4294901760
      %1544 = vmatpush1.msra.mxu0 %v1543
      %1545 = vmatprep.subr.mxu0 0.0
      %v1546 = vand.u32 %v545, 4294901760
      %v1547 = vsub.f32 %v545, %v1546
      %v1548 = vand.u32 %v1547, 4294901760
      %1549 = vmatpush1.msra.mxu0 %v1548
      %1550 = vmatprep.subr.mxu0 0.0
      %v1551 = vand.u32 %v546, 4294901760
      %v1552 = vsub.f32 %v546, %v1551
      %v1553 = vand.u32 %v1552, 4294901760
      %1554 = vmatpush1.msra.mxu0 %v1553
      %1555 = vmatprep.subr.mxu0 0.0
      %v1556 = vand.u32 %v547, 4294901760
      %v1557 = vsub.f32 %v547, %v1556
      %v1558 = vand.u32 %v1557, 4294901760
      %1559 = vmatpush1.msra.mxu0 %v1558
      %1560 = vmatprep.subr.mxu0 0.0
      %v1561 = vand.u32 %v548, 4294901760
      %v1562 = vsub.f32 %v548, %v1561
      %v1563 = vand.u32 %v1562, 4294901760
      %1564 = vmatpush1.msra.mxu0 %v1563
      %1565 = vmatprep.subr.mxu0 0.0
      %v1566 = vand.u32 %v549, 4294901760
      %v1567 = vsub.f32 %v549, %v1566
      %v1568 = vand.u32 %v1567, 4294901760
      %1569 = vmatpush1.msra.mxu0 %v1568
      %1570 = vmatprep.subr.mxu0 0.0
      %v1571 = vand.u32 %v550, 4294901760
      %v1572 = vsub.f32 %v550, %v1571
      %v1573 = vand.u32 %v1572, 4294901760
      %1574 = vmatpush1.msra.mxu0 %v1573
      %1575 = vmatprep.subr.mxu0 0.0
      %v1576 = vand.u32 %v551, 4294901760
      %v1577 = vsub.f32 %v551, %v1576
      %v1578 = vand.u32 %v1577, 4294901760
      %1579 = vmatpush1.msra.mxu0 %v1578
      %1580 = vmatprep.subr.mxu0 0.0
      %v1581 = vand.u32 %v552, 4294901760
      %v1582 = vsub.f32 %v552, %v1581
      %v1583 = vand.u32 %v1582, 4294901760
      %1584 = vmatpush1.msra.mxu0 %v1583
      %1585 = vmatprep.subr.mxu0 0.0
      %v1586 = vand.u32 %v553, 4294901760
      %v1587 = vsub.f32 %v553, %v1586
      %v1588 = vand.u32 %v1587, 4294901760
      %1589 = vmatpush1.msra.mxu0 %v1588
      %1590 = vmatprep.subr.mxu0 0.0
      %v1591 = vand.u32 %v554, 4294901760
      %v1592 = vsub.f32 %v554, %v1591
      %v1593 = vand.u32 %v1592, 4294901760
      %1594 = vmatpush1.msra.mxu0 %v1593
      %1595 = vmatprep.subr.mxu0 0.0
      %v1596 = vand.u32 %v555, 4294901760
      %v1597 = vsub.f32 %v555, %v1596
      %v1598 = vand.u32 %v1597, 4294901760
      %1599 = vmatpush1.msra.mxu0 %v1598
      %1600 = vmatprep.subr.mxu0 0.0
      %v1601 = vand.u32 %v556, 4294901760
      %v1602 = vsub.f32 %v556, %v1601
      %v1603 = vand.u32 %v1602, 4294901760
      %1604 = vmatpush1.msra.mxu0 %v1603
      %1605 = vmatprep.subr.mxu0 0.0
      %v1606 = vand.u32 %v557, 4294901760
      %v1607 = vsub.f32 %v557, %v1606
      %v1608 = vand.u32 %v1607, 4294901760
      %1609 = vmatpush1.msra.mxu0 %v1608
      %1610 = vmatprep.subr.mxu0 0.0
      %v1611 = vand.u32 %v558, 4294901760
      %v1612 = vsub.f32 %v558, %v1611
      %v1613 = vand.u32 %v1612, 4294901760
      %1614 = vmatpush1.msra.mxu0 %v1613
      %1615 = vmatprep.subr.mxu0 0.0
      %v1616 = vand.u32 %v559, 4294901760
      %v1617 = vsub.f32 %v559, %v1616
      %v1618 = vand.u32 %v1617, 4294901760
      %1619 = vmatpush1.msra.mxu0 %v1618
      %1620 = vmatprep.subr.mxu0 0.0
      %v1621 = vand.u32 %v560, 4294901760
      %v1622 = vsub.f32 %v560, %v1621
      %v1623 = vand.u32 %v1622, 4294901760
      %1624 = vmatpush1.msra.mxu0 %v1623
      %1625 = vmatprep.subr.mxu0 0.0
      %v1626 = vand.u32 %v561, 4294901760
      %v1627 = vsub.f32 %v561, %v1626
      %v1628 = vand.u32 %v1627, 4294901760
      %1629 = vmatpush1.msra.mxu0 %v1628
      %1630 = vmatprep.subr.mxu0 0.0
      %v1631 = vand.u32 %v562, 4294901760
      %v1632 = vsub.f32 %v562, %v1631
      %v1633 = vand.u32 %v1632, 4294901760
      %1634 = vmatpush1.msra.mxu0 %v1633
      %1635 = vmatprep.subr.mxu0 0.0
      %v1636 = vand.u32 %v563, 4294901760
      %v1637 = vsub.f32 %v563, %v1636
      %v1638 = vand.u32 %v1637, 4294901760
      %1639 = vmatpush1.msra.mxu0 %v1638
      %v1640 = vand.u32 %v501, 4294901760
      %1641 = vmatprep.mubr.f32.mxu0 %v1640
      %v1642 = vand.u32 %v500, 4294901760
      %1643 = vmatmul.mubr.f32.gmra.mrb[0].mxu0 %v1642
      %v1644 = vpop.f32.mrb[0].mxu0
      %v1645 = vadd.f32 %v1400, %v1644
      %v1646 = vpop.f32.mrb[0].mxu0
      %v1647 = vand.u32 %v505, 4294901760
      %1648 = vmatprep.mubr.f32.mxu0 %v1647
      %v1649 = vand.u32 %v504, 4294901760
      %1650 = vmatmul.mubr.f32.gmra.mrb[0].mxu0 %v1649
      %v1651 = vpop.f32.mrb[0].mxu0
      %v1652 = vadd.f32 %v1411, %v1651
      %v1653 = vpop.f32.mrb[0].mxu0
      %v1654 = vand.u32 %v509, 4294901760
      %1655 = vmatprep.mubr.f32.mxu0 %v1654
      %v1656 = vand.u32 %v508, 4294901760
      %1657 = vmatmul.mubr.f32.gmra.mrb[0].mxu0 %v1656
      %v1658 = vpop.f32.mrb[0].mxu0
      %v1659 = vadd.f32 %v1422, %v1658
      %v1660 = vpop.f32.mrb[0].mxu0
      %v1661 = vand.u32 %v513, 4294901760
      %1662 = vmatprep.mubr.f32.mxu0 %v1661
      %v1663 = vand.u32 %v512, 4294901760
      %1664 = vmatmul.mubr.f32.gmra.mrb[0].mxu0 %v1663
      %v1665 = vpop.f32.mrb[0].mxu0
      %v1666 = vadd.f32 %v1433, %v1665
      %v1667 = vpop.f32.mrb[0].mxu0
      %v1668 = vand.u32 %v517, 4294901760
      %1669 = vmatprep.mubr.f32.mxu0 %v1668
      %v1670 = vand.u32 %v516, 4294901760
      %1671 = vmatmul.mubr.f32.gmra.mrb[0].mxu0 %v1670
      %v1672 = vpop.f32.mrb[0].mxu0
      %v1673 = vadd.f32 %v1444, %v1672
      %v1674 = vpop.f32.mrb[0].mxu0
      %v1675 = vand.u32 %v521, 4294901760
      %1676 = vmatprep.mubr.f32.mxu0 %v1675
      %v1677 = vand.u32 %v520, 4294901760
      %1678 = vmatmul.mubr.f32.gmra.mrb[0].mxu0 %v1677
      %v1679 = vpop.f32.mrb[0].mxu0
      %v1680 = vadd.f32 %v1455, %v1679
      %v1681 = vpop.f32.mrb[0].mxu0
      %v1682 = vand.u32 %v525, 4294901760
      %1683 = vmatprep.mubr.f32.mxu0 %v1682
      %v1684 = vand.u32 %v524, 4294901760
      %1685 = vmatmul.mubr.f32.gmra.mrb[0].mxu0 %v1684
      %v1686 = vpop.f32.mrb[0].mxu0
      %v1687 = vadd.f32 %v1466, %v1686
      %v1688 = vpop.f32.mrb[0].mxu0
      %v1689 = vand.u32 %v529, 4294901760
      %1690 = vmatprep.mubr.f32.mxu0 %v1689
      %v1691 = vand.u32 %v528, 4294901760
      %1692 = vmatmul.mubr.f32.gmra.mrb[0].mxu0 %v1691
      %v1693 = vpop.f32.mrb[0].mxu0
      %v1694 = vadd.f32 %v1477, %v1693
      %v1695 = vpop.f32.mrb[0].mxu0
      %1696 = vdwg.mxu0
      %1697 = vmatprep.subr.mxu0 0.0
      %v1698 = vand.u32 %v532, 4294901760
      %1699 = vmatpush1.msra.mxu0 %v1698
      %1700 = vmatprep.subr.mxu0 0.0
      %v1701 = vand.u32 %v533, 4294901760
      %1702 = vmatpush1.msra.mxu0 %v1701
      %1703 = vmatprep.subr.mxu0 0.0
      %v1704 = vand.u32 %v534, 4294901760
      %1705 = vmatpush1.msra.mxu0 %v1704
      %1706 = vmatprep.subr.mxu0 0.0
      %v1707 = vand.u32 %v535, 4294901760
      %1708 = vmatpush1.msra.mxu0 %v1707
      %1709 = vmatprep.subr.mxu0 0.0
      %v1710 = vand.u32 %v536, 4294901760
      %1711 = vmatpush1.msra.mxu0 %v1710
      %1712 = vmatprep.subr.mxu0 0.0
      %v1713 = vand.u32 %v537, 4294901760
      %1714 = vmatpush1.msra.mxu0 %v1713
      %1715 = vmatprep.subr.mxu0 0.0
      %v1716 = vand.u32 %v538, 4294901760
      %1717 = vmatpush1.msra.mxu0 %v1716
      %1718 = vmatprep.subr.mxu0 0.0
      %v1719 = vand.u32 %v539, 4294901760
      %1720 = vmatpush1.msra.mxu0 %v1719
      %1721 = vmatprep.subr.mxu0 0.0
      %v1722 = vand.u32 %v540, 4294901760
      %1723 = vmatpush1.msra.mxu0 %v1722
      %1724 = vmatprep.subr.mxu0 0.0
      %v1725 = vand.u32 %v541, 4294901760
      %1726 = vmatpush1.msra.mxu0 %v1725
      %1727 = vmatprep.subr.mxu0 0.0
      %v1728 = vand.u32 %v542, 4294901760
      %1729 = vmatpush1.msra.mxu0 %v1728
      %1730 = vmatprep.subr.mxu0 0.0
      %v1731 = vand.u32 %v543, 4294901760
      %1732 = vmatpush1.msra.mxu0 %v1731
      %1733 = vmatprep.subr.mxu0 0.0
      %v1734 = vand.u32 %v544, 4294901760
      %1735 = vmatpush1.msra.mxu0 %v1734
      %1736 = vmatprep.subr.mxu0 0.0
      %v1737 = vand.u32 %v545, 4294901760
      %1738 = vmatpush1.msra.mxu0 %v1737
      %1739 = vmatprep.subr.mxu0 0.0
      %v1740 = vand.u32 %v546, 4294901760
      %1741 = vmatpush1.msra.mxu0 %v1740
      %1742 = vmatprep.subr.mxu0 0.0
      %v1743 = vand.u32 %v547, 4294901760
      %1744 = vmatpush1.msra.mxu0 %v1743
      %1745 = vmatprep.subr.mxu0 0.0
      %v1746 = vand.u32 %v548, 4294901760
      %1747 = vmatpush1.msra.mxu0 %v1746
      %1748 = vmatprep.subr.mxu0 0.0
      %v1749 = vand.u32 %v549, 4294901760
      %1750 = vmatpush1.msra.mxu0 %v1749
      %1751 = vmatprep.subr.mxu0 0.0
      %v1752 = vand.u32 %v550, 4294901760
      %1753 = vmatpush1.msra.mxu0 %v1752
      %1754 = vmatprep.subr.mxu0 0.0
      %v1755 = vand.u32 %v551, 4294901760
      %1756 = vmatpush1.msra.mxu0 %v1755
      %1757 = vmatprep.subr.mxu0 0.0
      %v1758 = vand.u32 %v552, 4294901760
      %1759 = vmatpush1.msra.mxu0 %v1758
      %1760 = vmatprep.subr.mxu0 0.0
      %v1761 = vand.u32 %v553, 4294901760
      %1762 = vmatpush1.msra.mxu0 %v1761
      %1763 = vmatprep.subr.mxu0 0.0
      %v1764 = vand.u32 %v554, 4294901760
      %1765 = vmatpush1.msra.mxu0 %v1764
      %1766 = vmatprep.subr.mxu0 0.0
      %v1767 = vand.u32 %v555, 4294901760
      %1768 = vmatpush1.msra.mxu0 %v1767
      %1769 = vmatprep.subr.mxu0 0.0
      %v1770 = vand.u32 %v556, 4294901760
      %1771 = vmatpush1.msra.mxu0 %v1770
      %1772 = vmatprep.subr.mxu0 0.0
      %v1773 = vand.u32 %v557, 4294901760
      %1774 = vmatpush1.msra.mxu0 %v1773
      %1775 = vmatprep.subr.mxu0 0.0
      %v1776 = vand.u32 %v558, 4294901760
      %1777 = vmatpush1.msra.mxu0 %v1776
      %1778 = vmatprep.subr.mxu0 0.0
      %v1779 = vand.u32 %v559, 4294901760
      %1780 = vmatpush1.msra.mxu0 %v1779
      %1781 = vmatprep.subr.mxu0 0.0
      %v1782 = vand.u32 %v560, 4294901760
      %1783 = vmatpush1.msra.mxu0 %v1782
      %1784 = vmatprep.subr.mxu0 0.0
      %v1785 = vand.u32 %v561, 4294901760
      %1786 = vmatpush1.msra.mxu0 %v1785
      %1787 = vmatprep.subr.mxu0 0.0
      %v1788 = vand.u32 %v562, 4294901760
      %1789 = vmatpush1.msra.mxu0 %v1788
      %1790 = vmatprep.subr.mxu0 0.0
      %v1791 = vand.u32 %v563, 4294901760
      %1792 = vmatpush1.msra.mxu0 %v1791
      %v1793 = vand.u32 %v501, 4294901760
      %1794 = vmatprep.mubr.f32.mxu0 %v1793
      %v1795 = vand.u32 %v500, 4294901760
      %1796 = vmatmul.mubr.f32.gmra.mrb[0].mxu0 %v1795
      %v1797 = vpop.f32.mrb[0].mxu0
      %v1798 = vadd.f32 %v1645, %v1797
      %v1799 = vpop.f32.mrb[0].mxu0
      %v1800 = vand.u32 %v505, 4294901760
      %1801 = vmatprep.mubr.f32.mxu0 %v1800
      %v1802 = vand.u32 %v504, 4294901760
      %1803 = vmatmul.mubr.f32.gmra.mrb[0].mxu0 %v1802
      %v1804 = vpop.f32.mrb[0].mxu0
      %v1805 = vadd.f32 %v1652, %v1804
      %v1806 = vpop.f32.mrb[0].mxu0
      %v1807 = vand.u32 %v509, 4294901760
      %1808 = vmatprep.mubr.f32.mxu0 %v1807
      %v1809 = vand.u32 %v508, 4294901760
      %1810 = vmatmul.mubr.f32.gmra.mrb[0].mxu0 %v1809
      %v1811 = vpop.f32.mrb[0].mxu0
      %v1812 = vadd.f32 %v1659, %v1811
      %v1813 = vpop.f32.mrb[0].mxu0
      %v1814 = vand.u32 %v513, 4294901760
      %1815 = vmatprep.mubr.f32.mxu0 %v1814
      %v1816 = vand.u32 %v512, 4294901760
      %1817 = vmatmul.mubr.f32.gmra.mrb[0].mxu0 %v1816
      %v1818 = vpop.f32.mrb[0].mxu0
      %v1819 = vadd.f32 %v1666, %v1818
      %v1820 = vpop.f32.mrb[0].mxu0
      %v1821 = vand.u32 %v517, 4294901760
      %1822 = vmatprep.mubr.f32.mxu0 %v1821
      %v1823 = vand.u32 %v516, 4294901760
      %1824 = vmatmul.mubr.f32.gmra.mrb[0].mxu0 %v1823
      %v1825 = vpop.f32.mrb[0].mxu0
      %v1826 = vadd.f32 %v1673, %v1825
      %v1827 = vpop.f32.mrb[0].mxu0
      %v1828 = vand.u32 %v521, 4294901760
      %1829 = vmatprep.mubr.f32.mxu0 %v1828
      %v1830 = vand.u32 %v520, 4294901760
      %1831 = vmatmul.mubr.f32.gmra.mrb[0].mxu0 %v1830
      %v1832 = vpop.f32.mrb[0].mxu0
      %v1833 = vadd.f32 %v1680, %v1832
      %v1834 = vpop.f32.mrb[0].mxu0
      %v1835 = vand.u32 %v525, 4294901760
      %1836 = vmatprep.mubr.f32.mxu0 %v1835
      %v1837 = vand.u32 %v524, 4294901760
      %1838 = vmatmul.mubr.f32.gmra.mrb[0].mxu0 %v1837
      %v1839 = vpop.f32.mrb[0].mxu0
      %v1840 = vadd.f32 %v1687, %v1839
      %v1841 = vpop.f32.mrb[0].mxu0
      %v1842 = vand.u32 %v529, 4294901760
      %1843 = vmatprep.mubr.f32.mxu0 %v1842
      %v1844 = vand.u32 %v528, 4294901760
      %1845 = vmatmul.mubr.f32.gmra.mrb[0].mxu0 %v1844
      %v1846 = vpop.f32.mrb[0].mxu0
      %v1847 = vadd.f32 %v1694, %v1846
      %v1848 = vpop.f32.mrb[0].mxu0
      %1849 = vdwg.mxu0
      %1850 = vmatprep.subr.mxu0 0.0
      %v1851 = vand.u32 %v564, 4294901760
      %1852 = vmatpush1.msra.mxu0 %v1851
      %1853 = vmatprep.subr.mxu0 0.0
      %v1854 = vand.u32 %v565, 4294901760
      %1855 = vmatpush1.msra.mxu0 %v1854
      %1856 = vmatprep.subr.mxu0 0.0
      %v1857 = vand.u32 %v566, 4294901760
      %1858 = vmatpush1.msra.mxu0 %v1857
      %1859 = vmatprep.subr.mxu0 0.0
      %v1860 = vand.u32 %v567, 4294901760
      %1861 = vmatpush1.msra.mxu0 %v1860
      %1862 = vmatprep.subr.mxu0 0.0
      %v1863 = vand.u32 %v568, 4294901760
      %1864 = vmatpush1.msra.mxu0 %v1863
      %1865 = vmatprep.subr.mxu0 0.0
      %v1866 = vand.u32 %v569, 4294901760
      %1867 = vmatpush1.msra.mxu0 %v1866
      %1868 = vmatprep.subr.mxu0 0.0
      %v1869 = vand.u32 %v570, 4294901760
      %1870 = vmatpush1.msra.mxu0 %v1869
      %1871 = vmatprep.subr.mxu0 0.0
      %v1872 = vand.u32 %v571, 4294901760
      %1873 = vmatpush1.msra.mxu0 %v1872
      %1874 = vmatprep.subr.mxu0 0.0
      %v1875 = vand.u32 %v572, 4294901760
      %1876 = vmatpush1.msra.mxu0 %v1875
      %1877 = vmatprep.subr.mxu0 0.0
      %v1878 = vand.u32 %v573, 4294901760
      %1879 = vmatpush1.msra.mxu0 %v1878
      %1880 = vmatprep.subr.mxu0 0.0
      %v1881 = vand.u32 %v574, 4294901760
      %1882 = vmatpush1.msra.mxu0 %v1881
      %1883 = vmatprep.subr.mxu0 0.0
      %v1884 = vand.u32 %v575, 4294901760
      %1885 = vmatpush1.msra.mxu0 %v1884
      %1886 = vmatprep.subr.mxu0 0.0
      %v1887 = vand.u32 %v576, 4294901760
      %1888 = vmatpush1.msra.mxu0 %v1887
      %1889 = vmatprep.subr.mxu0 0.0
      %v1890 = vand.u32 %v577, 4294901760
      %1891 = vmatpush1.msra.mxu0 %v1890
      %1892 = vmatprep.subr.mxu0 0.0
      %v1893 = vand.u32 %v578, 4294901760
      %1894 = vmatpush1.msra.mxu0 %v1893
      %1895 = vmatprep.subr.mxu0 0.0
      %v1896 = vand.u32 %v579, 4294901760
      %1897 = vmatpush1.msra.mxu0 %v1896
      %1898 = vmatprep.subr.mxu0 0.0
      %v1899 = vand.u32 %v580, 4294901760
      %1900 = vmatpush1.msra.mxu0 %v1899
      %1901 = vmatprep.subr.mxu0 0.0
      %v1902 = vand.u32 %v581, 4294901760
      %1903 = vmatpush1.msra.mxu0 %v1902
      %1904 = vmatprep.subr.mxu0 0.0
      %v1905 = vand.u32 %v582, 4294901760
      %1906 = vmatpush1.msra.mxu0 %v1905
      %1907 = vmatprep.subr.mxu0 0.0
      %v1908 = vand.u32 %v583, 4294901760
      %1909 = vmatpush1.msra.mxu0 %v1908
      %1910 = vmatprep.subr.mxu0 0.0
      %v1911 = vand.u32 %v584, 4294901760
      %1912 = vmatpush1.msra.mxu0 %v1911
      %1913 = vmatprep.subr.mxu0 0.0
      %v1914 = vand.u32 %v585, 4294901760
      %1915 = vmatpush1.msra.mxu0 %v1914
      %1916 = vmatprep.subr.mxu0 0.0
      %v1917 = vand.u32 %v586, 4294901760
      %1918 = vmatpush1.msra.mxu0 %v1917
      %1919 = vmatprep.subr.mxu0 0.0
      %v1920 = vand.u32 %v587, 4294901760
      %1921 = vmatpush1.msra.mxu0 %v1920
      %1922 = vmatprep.subr.mxu0 0.0
      %v1923 = vand.u32 %v588, 4294901760
      %1924 = vmatpush1.msra.mxu0 %v1923
      %1925 = vmatprep.subr.mxu0 0.0
      %v1926 = vand.u32 %v589, 4294901760
      %1927 = vmatpush1.msra.mxu0 %v1926
      %1928 = vmatprep.subr.mxu0 0.0
      %v1929 = vand.u32 %v590, 4294901760
      %1930 = vmatpush1.msra.mxu0 %v1929
      %1931 = vmatprep.subr.mxu0 0.0
      %v1932 = vand.u32 %v591, 4294901760
      %1933 = vmatpush1.msra.mxu0 %v1932
      %1934 = vmatprep.subr.mxu0 0.0
      %v1935 = vand.u32 %v592, 4294901760
      %1936 = vmatpush1.msra.mxu0 %v1935
      %1937 = vmatprep.subr.mxu0 0.0
      %v1938 = vand.u32 %v593, 4294901760
      %1939 = vmatpush1.msra.mxu0 %v1938
      %1940 = vmatprep.subr.mxu0 0.0
      %v1941 = vand.u32 %v594, 4294901760
      %1942 = vmatpush1.msra.mxu0 %v1941
      %1943 = vmatprep.subr.mxu0 0.0
      %v1944 = vand.u32 %v595, 4294901760
      %1945 = vmatpush1.msra.mxu0 %v1944
      %v1946 = vand.u32 %v503, 4294901760
      %v1947 = vsub.f32 %v503, %v1946
      %v1948 = vand.u32 %v1947, 4294901760
      %v1949 = vsub.f32 %v1947, %v1948
      %v1950 = vand.u32 %v1949, 4294901760
      %1951 = vmatprep.mubr.f32.mxu0 %v1950
      %v1952 = vand.u32 %v502, 4294901760
      %v1953 = vsub.f32 %v502, %v1952
      %v1954 = vand.u32 %v1953, 4294901760
      %v1955 = vsub.f32 %v1953, %v1954
      %v1956 = vand.u32 %v1955, 4294901760
      %1957 = vmatmul.mubr.f32.gmra.mrb[0].mxu0 %v1956
      %v1958 = vpop.f32.mrb[0].mxu0
      %v1959 = vadd.f32 %v1798, %v1958
      %v1960 = vpop.f32.mrb[0].mxu0
      %v1961 = vand.u32 %v507, 4294901760
      %v1962 = vsub.f32 %v507, %v1961
      %v1963 = vand.u32 %v1962, 4294901760
      %v1964 = vsub.f32 %v1962, %v1963
      %v1965 = vand.u32 %v1964, 4294901760
      %1966 = vmatprep.mubr.f32.mxu0 %v1965
      %v1967 = vand.u32 %v506, 4294901760
      %v1968 = vsub.f32 %v506, %v1967
      %v1969 = vand.u32 %v1968, 4294901760
      %v1970 = vsub.f32 %v1968, %v1969
      %v1971 = vand.u32 %v1970, 4294901760
      %1972 = vmatmul.mubr.f32.gmra.mrb[0].mxu0 %v1971
      %v1973 = vpop.f32.mrb[0].mxu0
      %v1974 = vadd.f32 %v1805, %v1973
      %v1975 = vpop.f32.mrb[0].mxu0
      %v1976 = vand.u32 %v511, 4294901760
      %v1977 = vsub.f32 %v511, %v1976
      %v1978 = vand.u32 %v1977, 4294901760
      %v1979 = vsub.f32 %v1977, %v1978
      %v1980 = vand.u32 %v1979, 4294901760
      %1981 = vmatprep.mubr.f32.mxu0 %v1980
      %v1982 = vand.u32 %v510, 4294901760
      %v1983 = vsub.f32 %v510, %v1982
      %v1984 = vand.u32 %v1983, 4294901760
      %v1985 = vsub.f32 %v1983, %v1984
      %v1986 = vand.u32 %v1985, 4294901760
      %1987 = vmatmul.mubr.f32.gmra.mrb[0].mxu0 %v1986
      %v1988 = vpop.f32.mrb[0].mxu0
      %v1989 = vadd.f32 %v1812, %v1988
      %v1990 = vpop.f32.mrb[0].mxu0
      %v1991 = vand.u32 %v515, 4294901760
      %v1992 = vsub.f32 %v515, %v1991
      %v1993 = vand.u32 %v1992, 4294901760
      %v1994 = vsub.f32 %v1992, %v1993
      %v1995 = vand.u32 %v1994, 4294901760
      %1996 = vmatprep.mubr.f32.mxu0 %v1995
      %v1997 = vand.u32 %v514, 4294901760
      %v1998 = vsub.f32 %v514, %v1997
      %v1999 = vand.u32 %v1998, 4294901760
      %v2000 = vsub.f32 %v1998, %v1999
      %v2001 = vand.u32 %v2000, 4294901760
      %2002 = vmatmul.mubr.f32.gmra.mrb[0].mxu0 %v2001
      %v2003 = vpop.f32.mrb[0].mxu0
      %v2004 = vadd.f32 %v1819, %v2003
      %v2005 = vpop.f32.mrb[0].mxu0
      %v2006 = vand.u32 %v519, 4294901760
      %v2007 = vsub.f32 %v519, %v2006
      %v2008 = vand.u32 %v2007, 4294901760
      %v2009 = vsub.f32 %v2007, %v2008
      %v2010 = vand.u32 %v2009, 4294901760
      %2011 = vmatprep.mubr.f32.mxu0 %v2010
      %v2012 = vand.u32 %v518, 4294901760
      %v2013 = vsub.f32 %v518, %v2012
      %v2014 = vand.u32 %v2013, 4294901760
      %v2015 = vsub.f32 %v2013, %v2014
      %v2016 = vand.u32 %v2015, 4294901760
      %2017 = vmatmul.mubr.f32.gmra.mrb[0].mxu0 %v2016
      %v2018 = vpop.f32.mrb[0].mxu0
      %v2019 = vadd.f32 %v1826, %v2018
      %v2020 = vpop.f32.mrb[0].mxu0
      %v2021 = vand.u32 %v523, 4294901760
      %v2022 = vsub.f32 %v523, %v2021
      %v2023 = vand.u32 %v2022, 4294901760
      %v2024 = vsub.f32 %v2022, %v2023
      %v2025 = vand.u32 %v2024, 4294901760
      %2026 = vmatprep.mubr.f32.mxu0 %v2025
      %v2027 = vand.u32 %v522, 4294901760
      %v2028 = vsub.f32 %v522, %v2027
      %v2029 = vand.u32 %v2028, 4294901760
      %v2030 = vsub.f32 %v2028, %v2029
      %v2031 = vand.u32 %v2030, 4294901760
      %2032 = vmatmul.mubr.f32.gmra.mrb[0].mxu0 %v2031
      %v2033 = vpop.f32.mrb[0].mxu0
      %v2034 = vadd.f32 %v1833, %v2033
      %v2035 = vpop.f32.mrb[0].mxu0
      %v2036 = vand.u32 %v527, 4294901760
      %v2037 = vsub.f32 %v527, %v2036
      %v2038 = vand.u32 %v2037, 4294901760
      %v2039 = vsub.f32 %v2037, %v2038
      %v2040 = vand.u32 %v2039, 4294901760
      %2041 = vmatprep.mubr.f32.mxu0 %v2040
      %v2042 = vand.u32 %v526, 4294901760
      %v2043 = vsub.f32 %v526, %v2042
      %v2044 = vand.u32 %v2043, 4294901760
      %v2045 = vsub.f32 %v2043, %v2044
      %v2046 = vand.u32 %v2045, 4294901760
      %2047 = vmatmul.mubr.f32.gmra.mrb[0].mxu0 %v2046
      %v2048 = vpop.f32.mrb[0].mxu0
      %v2049 = vadd.f32 %v1840, %v2048
      %v2050 = vpop.f32.mrb[0].mxu0
      %v2051 = vand.u32 %v531, 4294901760
      %v2052 = vsub.f32 %v531, %v2051
      %v2053 = vand.u32 %v2052, 4294901760
      %v2054 = vsub.f32 %v2052, %v2053
      %v2055 = vand.u32 %v2054, 4294901760
      %2056 = vmatprep.mubr.f32.mxu0 %v2055
      %v2057 = vand.u32 %v530, 4294901760
      %v2058 = vsub.f32 %v530, %v2057
      %v2059 = vand.u32 %v2058, 4294901760
      %v2060 = vsub.f32 %v2058, %v2059
      %v2061 = vand.u32 %v2060, 4294901760
      %2062 = vmatmul.mubr.f32.gmra.mrb[0].mxu0 %v2061
      %v2063 = vpop.f32.mrb[0].mxu0
      %v2064 = vadd.f32 %v1847, %v2063
      %v2065 = vpop.f32.mrb[0].mxu0
      %2066 = vdwg.mxu0
      %2067 = vmatprep.subr.mxu0 0.0
      %v2068 = vand.u32 %v564, 4294901760
      %v2069 = vsub.f32 %v564, %v2068
      %v2070 = vand.u32 %v2069, 4294901760
      %v2071 = vsub.f32 %v2069, %v2070
      %v2072 = vand.u32 %v2071, 4294901760
      %2073 = vmatpush1.msra.mxu0 %v2072
      %2074 = vmatprep.subr.mxu0 0.0
      %v2075 = vand.u32 %v565, 4294901760
      %v2076 = vsub.f32 %v565, %v2075
      %v2077 = vand.u32 %v2076, 4294901760
      %v2078 = vsub.f32 %v2076, %v2077
      %v2079 = vand.u32 %v2078, 4294901760
      %2080 = vmatpush1.msra.mxu0 %v2079
      %2081 = vmatprep.subr.mxu0 0.0
      %v2082 = vand.u32 %v566, 4294901760
      %v2083 = vsub.f32 %v566, %v2082
      %v2084 = vand.u32 %v2083, 4294901760
      %v2085 = vsub.f32 %v2083, %v2084
      %v2086 = vand.u32 %v2085, 4294901760
      %2087 = vmatpush1.msra.mxu0 %v2086
      %2088 = vmatprep.subr.mxu0 0.0
      %v2089 = vand.u32 %v567, 4294901760
      %v2090 = vsub.f32 %v567, %v2089
      %v2091 = vand.u32 %v2090, 4294901760
      %v2092 = vsub.f32 %v2090, %v2091
      %v2093 = vand.u32 %v2092, 4294901760
      %2094 = vmatpush1.msra.mxu0 %v2093
      %2095 = vmatprep.subr.mxu0 0.0
      %v2096 = vand.u32 %v568, 4294901760
      %v2097 = vsub.f32 %v568, %v2096
      %v2098 = vand.u32 %v2097, 4294901760
      %v2099 = vsub.f32 %v2097, %v2098
      %v2100 = vand.u32 %v2099, 4294901760
      %2101 = vmatpush1.msra.mxu0 %v2100
      %2102 = vmatprep.subr.mxu0 0.0
      %v2103 = vand.u32 %v569, 4294901760
      %v2104 = vsub.f32 %v569, %v2103
      %v2105 = vand.u32 %v2104, 4294901760
      %v2106 = vsub.f32 %v2104, %v2105
      %v2107 = vand.u32 %v2106, 4294901760
      %2108 = vmatpush1.msra.mxu0 %v2107
      %2109 = vmatprep.subr.mxu0 0.0
      %v2110 = vand.u32 %v570, 4294901760
      %v2111 = vsub.f32 %v570, %v2110
      %v2112 = vand.u32 %v2111, 4294901760
      %v2113 = vsub.f32 %v2111, %v2112
      %v2114 = vand.u32 %v2113, 4294901760
      %2115 = vmatpush1.msra.mxu0 %v2114
      %2116 = vmatprep.subr.mxu0 0.0
      %v2117 = vand.u32 %v571, 4294901760
      %v2118 = vsub.f32 %v571, %v2117
      %v2119 = vand.u32 %v2118, 4294901760
      %v2120 = vsub.f32 %v2118, %v2119
      %v2121 = vand.u32 %v2120, 4294901760
      %2122 = vmatpush1.msra.mxu0 %v2121
      %2123 = vmatprep.subr.mxu0 0.0
      %v2124 = vand.u32 %v572, 4294901760
      %v2125 = vsub.f32 %v572, %v2124
      %v2126 = vand.u32 %v2125, 4294901760
      %v2127 = vsub.f32 %v2125, %v2126
      %v2128 = vand.u32 %v2127, 4294901760
      %2129 = vmatpush1.msra.mxu0 %v2128
      %2130 = vmatprep.subr.mxu0 0.0
      %v2131 = vand.u32 %v573, 4294901760
      %v2132 = vsub.f32 %v573, %v2131
      %v2133 = vand.u32 %v2132, 4294901760
      %v2134 = vsub.f32 %v2132, %v2133
      %v2135 = vand.u32 %v2134, 4294901760
      %2136 = vmatpush1.msra.mxu0 %v2135
      %2137 = vmatprep.subr.mxu0 0.0
      %v2138 = vand.u32 %v574, 4294901760
      %v2139 = vsub.f32 %v574, %v2138
      %v2140 = vand.u32 %v2139, 4294901760
      %v2141 = vsub.f32 %v2139, %v2140
      %v2142 = vand.u32 %v2141, 4294901760
      %2143 = vmatpush1.msra.mxu0 %v2142
      %2144 = vmatprep.subr.mxu0 0.0
      %v2145 = vand.u32 %v575, 4294901760
      %v2146 = vsub.f32 %v575, %v2145
      %v2147 = vand.u32 %v2146, 4294901760
      %v2148 = vsub.f32 %v2146, %v2147
      %v2149 = vand.u32 %v2148, 4294901760
      %2150 = vmatpush1.msra.mxu0 %v2149
      %2151 = vmatprep.subr.mxu0 0.0
      %v2152 = vand.u32 %v576, 4294901760
      %v2153 = vsub.f32 %v576, %v2152
      %v2154 = vand.u32 %v2153, 4294901760
      %v2155 = vsub.f32 %v2153, %v2154
      %v2156 = vand.u32 %v2155, 4294901760
      %2157 = vmatpush1.msra.mxu0 %v2156
      %2158 = vmatprep.subr.mxu0 0.0
      %v2159 = vand.u32 %v577, 4294901760
      %v2160 = vsub.f32 %v577, %v2159
      %v2161 = vand.u32 %v2160, 4294901760
      %v2162 = vsub.f32 %v2160, %v2161
      %v2163 = vand.u32 %v2162, 4294901760
      %2164 = vmatpush1.msra.mxu0 %v2163
      %2165 = vmatprep.subr.mxu0 0.0
      %v2166 = vand.u32 %v578, 4294901760
      %v2167 = vsub.f32 %v578, %v2166
      %v2168 = vand.u32 %v2167, 4294901760
      %v2169 = vsub.f32 %v2167, %v2168
      %v2170 = vand.u32 %v2169, 4294901760
      %2171 = vmatpush1.msra.mxu0 %v2170
      %2172 = vmatprep.subr.mxu0 0.0
      %v2173 = vand.u32 %v579, 4294901760
      %v2174 = vsub.f32 %v579, %v2173
      %v2175 = vand.u32 %v2174, 4294901760
      %v2176 = vsub.f32 %v2174, %v2175
      %v2177 = vand.u32 %v2176, 4294901760
      %2178 = vmatpush1.msra.mxu0 %v2177
      %2179 = vmatprep.subr.mxu0 0.0
      %v2180 = vand.u32 %v580, 4294901760
      %v2181 = vsub.f32 %v580, %v2180
      %v2182 = vand.u32 %v2181, 4294901760
      %v2183 = vsub.f32 %v2181, %v2182
      %v2184 = vand.u32 %v2183, 4294901760
      %2185 = vmatpush1.msra.mxu0 %v2184
      %2186 = vmatprep.subr.mxu0 0.0
      %v2187 = vand.u32 %v581, 4294901760
      %v2188 = vsub.f32 %v581, %v2187
      %v2189 = vand.u32 %v2188, 4294901760
      %v2190 = vsub.f32 %v2188, %v2189
      %v2191 = vand.u32 %v2190, 4294901760
      %2192 = vmatpush1.msra.mxu0 %v2191
      %2193 = vmatprep.subr.mxu0 0.0
      %v2194 = vand.u32 %v582, 4294901760
      %v2195 = vsub.f32 %v582, %v2194
      %v2196 = vand.u32 %v2195, 4294901760
      %v2197 = vsub.f32 %v2195, %v2196
      %v2198 = vand.u32 %v2197, 4294901760
      %2199 = vmatpush1.msra.mxu0 %v2198
      %2200 = vmatprep.subr.mxu0 0.0
      %v2201 = vand.u32 %v583, 4294901760
      %v2202 = vsub.f32 %v583, %v2201
      %v2203 = vand.u32 %v2202, 4294901760
      %v2204 = vsub.f32 %v2202, %v2203
      %v2205 = vand.u32 %v2204, 4294901760
      %2206 = vmatpush1.msra.mxu0 %v2205
      %2207 = vmatprep.subr.mxu0 0.0
      %v2208 = vand.u32 %v584, 4294901760
      %v2209 = vsub.f32 %v584, %v2208
      %v2210 = vand.u32 %v2209, 4294901760
      %v2211 = vsub.f32 %v2209, %v2210
      %v2212 = vand.u32 %v2211, 4294901760
      %2213 = vmatpush1.msra.mxu0 %v2212
      %2214 = vmatprep.subr.mxu0 0.0
      %v2215 = vand.u32 %v585, 4294901760
      %v2216 = vsub.f32 %v585, %v2215
      %v2217 = vand.u32 %v2216, 4294901760
      %v2218 = vsub.f32 %v2216, %v2217
      %v2219 = vand.u32 %v2218, 4294901760
      %2220 = vmatpush1.msra.mxu0 %v2219
      %2221 = vmatprep.subr.mxu0 0.0
      %v2222 = vand.u32 %v586, 4294901760
      %v2223 = vsub.f32 %v586, %v2222
      %v2224 = vand.u32 %v2223, 4294901760
      %v2225 = vsub.f32 %v2223, %v2224
      %v2226 = vand.u32 %v2225, 4294901760
      %2227 = vmatpush1.msra.mxu0 %v2226
      %2228 = vmatprep.subr.mxu0 0.0
      %v2229 = vand.u32 %v587, 4294901760
      %v2230 = vsub.f32 %v587, %v2229
      %v2231 = vand.u32 %v2230, 4294901760
      %v2232 = vsub.f32 %v2230, %v2231
      %v2233 = vand.u32 %v2232, 4294901760
      %2234 = vmatpush1.msra.mxu0 %v2233
      %2235 = vmatprep.subr.mxu0 0.0
      %v2236 = vand.u32 %v588, 4294901760
      %v2237 = vsub.f32 %v588, %v2236
      %v2238 = vand.u32 %v2237, 4294901760
      %v2239 = vsub.f32 %v2237, %v2238
      %v2240 = vand.u32 %v2239, 4294901760
      %2241 = vmatpush1.msra.mxu0 %v2240
      %2242 = vmatprep.subr.mxu0 0.0
      %v2243 = vand.u32 %v589, 4294901760
      %v2244 = vsub.f32 %v589, %v2243
      %v2245 = vand.u32 %v2244, 4294901760
      %v2246 = vsub.f32 %v2244, %v2245
      %v2247 = vand.u32 %v2246, 4294901760
      %2248 = vmatpush1.msra.mxu0 %v2247
      %2249 = vmatprep.subr.mxu0 0.0
      %v2250 = vand.u32 %v590, 4294901760
      %v2251 = vsub.f32 %v590, %v2250
      %v2252 = vand.u32 %v2251, 4294901760
      %v2253 = vsub.f32 %v2251, %v2252
      %v2254 = vand.u32 %v2253, 4294901760
      %2255 = vmatpush1.msra.mxu0 %v2254
      %2256 = vmatprep.subr.mxu0 0.0
      %v2257 = vand.u32 %v591, 4294901760
      %v2258 = vsub.f32 %v591, %v2257
      %v2259 = vand.u32 %v2258, 4294901760
      %v2260 = vsub.f32 %v2258, %v2259
      %v2261 = vand.u32 %v2260, 4294901760
      %2262 = vmatpush1.msra.mxu0 %v2261
      %2263 = vmatprep.subr.mxu0 0.0
      %v2264 = vand.u32 %v592, 4294901760
      %v2265 = vsub.f32 %v592, %v2264
      %v2266 = vand.u32 %v2265, 4294901760
      %v2267 = vsub.f32 %v2265, %v2266
      %v2268 = vand.u32 %v2267, 4294901760
      %2269 = vmatpush1.msra.mxu0 %v2268
      %2270 = vmatprep.subr.mxu0 0.0
      %v2271 = vand.u32 %v593, 4294901760
      %v2272 = vsub.f32 %v593, %v2271
      %v2273 = vand.u32 %v2272, 4294901760
      %v2274 = vsub.f32 %v2272, %v2273
      %v2275 = vand.u32 %v2274, 4294901760
      %2276 = vmatpush1.msra.mxu0 %v2275
      %2277 = vmatprep.subr.mxu0 0.0
      %v2278 = vand.u32 %v594, 4294901760
      %v2279 = vsub.f32 %v594, %v2278
      %v2280 = vand.u32 %v2279, 4294901760
      %v2281 = vsub.f32 %v2279, %v2280
      %v2282 = vand.u32 %v2281, 4294901760
      %2283 = vmatpush1.msra.mxu0 %v2282
      %2284 = vmatprep.subr.mxu0 0.0
      %v2285 = vand.u32 %v595, 4294901760
      %v2286 = vsub.f32 %v595, %v2285
      %v2287 = vand.u32 %v2286, 4294901760
      %v2288 = vsub.f32 %v2286, %v2287
      %v2289 = vand.u32 %v2288, 4294901760
      %2290 = vmatpush1.msra.mxu0 %v2289
      %v2291 = vand.u32 %v503, 4294901760
      %2292 = vmatprep.mubr.f32.mxu0 %v2291
      %v2293 = vand.u32 %v502, 4294901760
      %2294 = vmatmul.mubr.f32.gmra.mrb[0].mxu0 %v2293
      %v2295 = vpop.f32.mrb[0].mxu0
      %v2296 = vadd.f32 %v1959, %v2295
      %v2297 = vpop.f32.mrb[0].mxu0
      %v2298 = vand.u32 %v507, 4294901760
      %2299 = vmatprep.mubr.f32.mxu0 %v2298
      %v2300 = vand.u32 %v506, 4294901760
      %2301 = vmatmul.mubr.f32.gmra.mrb[0].mxu0 %v2300
      %v2302 = vpop.f32.mrb[0].mxu0
      %v2303 = vadd.f32 %v1974, %v2302
      %v2304 = vpop.f32.mrb[0].mxu0
      %v2305 = vand.u32 %v511, 4294901760
      %2306 = vmatprep.mubr.f32.mxu0 %v2305
      %v2307 = vand.u32 %v510, 4294901760
      %2308 = vmatmul.mubr.f32.gmra.mrb[0].mxu0 %v2307
      %v2309 = vpop.f32.mrb[0].mxu0
      %v2310 = vadd.f32 %v1989, %v2309
      %v2311 = vpop.f32.mrb[0].mxu0
      %v2312 = vand.u32 %v515, 4294901760
      %2313 = vmatprep.mubr.f32.mxu0 %v2312
      %v2314 = vand.u32 %v514, 4294901760
      %2315 = vmatmul.mubr.f32.gmra.mrb[0].mxu0 %v2314
      %v2316 = vpop.f32.mrb[0].mxu0
      %v2317 = vadd.f32 %v2004, %v2316
      %v2318 = vpop.f32.mrb[0].mxu0
      %v2319 = vand.u32 %v519, 4294901760
      %2320 = vmatprep.mubr.f32.mxu0 %v2319
      %v2321 = vand.u32 %v518, 4294901760
      %2322 = vmatmul.mubr.f32.gmra.mrb[0].mxu0 %v2321
      %v2323 = vpop.f32.mrb[0].mxu0
      %v2324 = vadd.f32 %v2019, %v2323
      %v2325 = vpop.f32.mrb[0].mxu0
      %v2326 = vand.u32 %v523, 4294901760
      %2327 = vmatprep.mubr.f32.mxu0 %v2326
      %v2328 = vand.u32 %v522, 4294901760
      %2329 = vmatmul.mubr.f32.gmra.mrb[0].mxu0 %v2328
      %v2330 = vpop.f32.mrb[0].mxu0
      %v2331 = vadd.f32 %v2034, %v2330
      %v2332 = vpop.f32.mrb[0].mxu0
      %v2333 = vand.u32 %v527, 4294901760
      %2334 = vmatprep.mubr.f32.mxu0 %v2333
      %v2335 = vand.u32 %v526, 4294901760
      %2336 = vmatmul.mubr.f32.gmra.mrb[0].mxu0 %v2335
      %v2337 = vpop.f32.mrb[0].mxu0
      %v2338 = vadd.f32 %v2049, %v2337
      %v2339 = vpop.f32.mrb[0].mxu0
      %v2340 = vand.u32 %v531, 4294901760
      %2341 = vmatprep.mubr.f32.mxu0 %v2340
      %v2342 = vand.u32 %v530, 4294901760
      %2343 = vmatmul.mubr.f32.gmra.mrb[0].mxu0 %v2342
      %v2344 = vpop.f32.mrb[0].mxu0
      %v2345 = vadd.f32 %v2064, %v2344
      %v2346 = vpop.f32.mrb[0].mxu0
      %2347 = vdwg.mxu0
      %2348 = vmatprep.subr.mxu0 0.0
      %v2349 = vand.u32 %v564, 4294901760
      %v2350 = vsub.f32 %v564, %v2349
      %2351 = vmatpush1.msra.mxu0 %v2350
      %2352 = vmatprep.subr.mxu0 0.0
      %v2353 = vand.u32 %v565, 4294901760
      %v2354 = vsub.f32 %v565, %v2353
      %2355 = vmatpush1.msra.mxu0 %v2354
      %2356 = vmatprep.subr.mxu0 0.0
      %v2357 = vand.u32 %v566, 4294901760
      %v2358 = vsub.f32 %v566, %v2357
      %2359 = vmatpush1.msra.mxu0 %v2358
      %2360 = vmatprep.subr.mxu0 0.0
      %v2361 = vand.u32 %v567, 4294901760
      %v2362 = vsub.f32 %v567, %v2361
      %2363 = vmatpush1.msra.mxu0 %v2362
      %2364 = vmatprep.subr.mxu0 0.0
      %v2365 = vand.u32 %v568, 4294901760
      %v2366 = vsub.f32 %v568, %v2365
      %2367 = vmatpush1.msra.mxu0 %v2366
      %2368 = vmatprep.subr.mxu0 0.0
      %v2369 = vand.u32 %v569, 4294901760
      %v2370 = vsub.f32 %v569, %v2369
      %2371 = vmatpush1.msra.mxu0 %v2370
      %2372 = vmatprep.subr.mxu0 0.0
      %v2373 = vand.u32 %v570, 4294901760
      %v2374 = vsub.f32 %v570, %v2373
      %2375 = vmatpush1.msra.mxu0 %v2374
      %2376 = vmatprep.subr.mxu0 0.0
      %v2377 = vand.u32 %v571, 4294901760
      %v2378 = vsub.f32 %v571, %v2377
      %2379 = vmatpush1.msra.mxu0 %v2378
      %2380 = vmatprep.subr.mxu0 0.0
      %v2381 = vand.u32 %v572, 4294901760
      %v2382 = vsub.f32 %v572, %v2381
      %2383 = vmatpush1.msra.mxu0 %v2382
      %2384 = vmatprep.subr.mxu0 0.0
      %v2385 = vand.u32 %v573, 4294901760
      %v2386 = vsub.f32 %v573, %v2385
      %2387 = vmatpush1.msra.mxu0 %v2386
      %2388 = vmatprep.subr.mxu0 0.0
      %v2389 = vand.u32 %v574, 4294901760
      %v2390 = vsub.f32 %v574, %v2389
      %2391 = vmatpush1.msra.mxu0 %v2390
      %2392 = vmatprep.subr.mxu0 0.0
      %v2393 = vand.u32 %v575, 4294901760
      %v2394 = vsub.f32 %v575, %v2393
      %2395 = vmatpush1.msra.mxu0 %v2394
      %2396 = vmatprep.subr.mxu0 0.0
      %v2397 = vand.u32 %v576, 4294901760
      %v2398 = vsub.f32 %v576, %v2397
      %2399 = vmatpush1.msra.mxu0 %v2398
      %2400 = vmatprep.subr.mxu0 0.0
      %v2401 = vand.u32 %v577, 4294901760
      %v2402 = vsub.f32 %v577, %v2401
      %2403 = vmatpush1.msra.mxu0 %v2402
      %2404 = vmatprep.subr.mxu0 0.0
      %v2405 = vand.u32 %v578, 4294901760
      %v2406 = vsub.f32 %v578, %v2405
      %2407 = vmatpush1.msra.mxu0 %v2406
      %2408 = vmatprep.subr.mxu0 0.0
      %v2409 = vand.u32 %v579, 4294901760
      %v2410 = vsub.f32 %v579, %v2409
      %2411 = vmatpush1.msra.mxu0 %v2410
      %2412 = vmatprep.subr.mxu0 0.0
      %v2413 = vand.u32 %v580, 4294901760
      %v2414 = vsub.f32 %v580, %v2413
      %2415 = vmatpush1.msra.mxu0 %v2414
      %2416 = vmatprep.subr.mxu0 0.0
      %v2417 = vand.u32 %v581, 4294901760
      %v2418 = vsub.f32 %v581, %v2417
      %2419 = vmatpush1.msra.mxu0 %v2418
      %2420 = vmatprep.subr.mxu0 0.0
      %v2421 = vand.u32 %v582, 4294901760
      %v2422 = vsub.f32 %v582, %v2421
      %2423 = vmatpush1.msra.mxu0 %v2422
      %2424 = vmatprep.subr.mxu0 0.0
      %v2425 = vand.u32 %v583, 4294901760
      %v2426 = vsub.f32 %v583, %v2425
      %2427 = vmatpush1.msra.mxu0 %v2426
      %2428 = vmatprep.subr.mxu0 0.0
      %v2429 = vand.u32 %v584, 4294901760
      %v2430 = vsub.f32 %v584, %v2429
      %2431 = vmatpush1.msra.mxu0 %v2430
      %2432 = vmatprep.subr.mxu0 0.0
      %v2433 = vand.u32 %v585, 4294901760
      %v2434 = vsub.f32 %v585, %v2433
      %2435 = vmatpush1.msra.mxu0 %v2434
      %2436 = vmatprep.subr.mxu0 0.0
      %v2437 = vand.u32 %v586, 4294901760
      %v2438 = vsub.f32 %v586, %v2437
      %2439 = vmatpush1.msra.mxu0 %v2438
      %2440 = vmatprep.subr.mxu0 0.0
      %v2441 = vand.u32 %v587, 4294901760
      %v2442 = vsub.f32 %v587, %v2441
      %2443 = vmatpush1.msra.mxu0 %v2442
      %2444 = vmatprep.subr.mxu0 0.0
      %v2445 = vand.u32 %v588, 4294901760
      %v2446 = vsub.f32 %v588, %v2445
      %2447 = vmatpush1.msra.mxu0 %v2446
      %2448 = vmatprep.subr.mxu0 0.0
      %v2449 = vand.u32 %v589, 4294901760
      %v2450 = vsub.f32 %v589, %v2449
      %2451 = vmatpush1.msra.mxu0 %v2450
      %2452 = vmatprep.subr.mxu0 0.0
      %v2453 = vand.u32 %v590, 4294901760
      %v2454 = vsub.f32 %v590, %v2453
      %2455 = vmatpush1.msra.mxu0 %v2454
      %2456 = vmatprep.subr.mxu0 0.0
      %v2457 = vand.u32 %v591, 4294901760
      %v2458 = vsub.f32 %v591, %v2457
      %2459 = vmatpush1.msra.mxu0 %v2458
      %2460 = vmatprep.subr.mxu0 0.0
      %v2461 = vand.u32 %v592, 4294901760
      %v2462 = vsub.f32 %v592, %v2461
      %2463 = vmatpush1.msra.mxu0 %v2462
      %2464 = vmatprep.subr.mxu0 0.0
      %v2465 = vand.u32 %v593, 4294901760
      %v2466 = vsub.f32 %v593, %v2465
      %2467 = vmatpush1.msra.mxu0 %v2466
      %2468 = vmatprep.subr.mxu0 0.0
      %v2469 = vand.u32 %v594, 4294901760
      %v2470 = vsub.f32 %v594, %v2469
      %2471 = vmatpush1.msra.mxu0 %v2470
      %2472 = vmatprep.subr.mxu0 0.0
      %v2473 = vand.u32 %v595, 4294901760
      %v2474 = vsub.f32 %v595, %v2473
      %2475 = vmatpush1.msra.mxu0 %v2474
      %v2476 = vand.u32 %v503, 4294901760
      %v2477 = vsub.f32 %v503, %v2476
      %2478 = vmatprep.mubr.f32.mxu0 %v2477
      %v2479 = vand.u32 %v502, 4294901760
      %v2480 = vsub.f32 %v502, %v2479
      %2481 = vmatmul.mubr.f32.gmra.mrb[0].mxu0 %v2480
      %v2482 = vpop.f32.mrb[0].mxu0
      %v2483 = vadd.f32 %v2296, %v2482
      %v2484 = vpop.f32.mrb[0].mxu0
      %v2485 = vand.u32 %v507, 4294901760
      %v2486 = vsub.f32 %v507, %v2485
      %2487 = vmatprep.mubr.f32.mxu0 %v2486
      %v2488 = vand.u32 %v506, 4294901760
      %v2489 = vsub.f32 %v506, %v2488
      %2490 = vmatmul.mubr.f32.gmra.mrb[0].mxu0 %v2489
      %v2491 = vpop.f32.mrb[0].mxu0
      %v2492 = vadd.f32 %v2303, %v2491
      %v2493 = vpop.f32.mrb[0].mxu0
      %v2494 = vand.u32 %v511, 4294901760
      %v2495 = vsub.f32 %v511, %v2494
      %2496 = vmatprep.mubr.f32.mxu0 %v2495
      %v2497 = vand.u32 %v510, 4294901760
      %v2498 = vsub.f32 %v510, %v2497
      %2499 = vmatmul.mubr.f32.gmra.mrb[0].mxu0 %v2498
      %v2500 = vpop.f32.mrb[0].mxu0
      %v2501 = vadd.f32 %v2310, %v2500
      %v2502 = vpop.f32.mrb[0].mxu0
      %v2503 = vand.u32 %v515, 4294901760
      %v2504 = vsub.f32 %v515, %v2503
      %2505 = vmatprep.mubr.f32.mxu0 %v2504
      %v2506 = vand.u32 %v514, 4294901760
      %v2507 = vsub.f32 %v514, %v2506
      %2508 = vmatmul.mubr.f32.gmra.mrb[0].mxu0 %v2507
      %v2509 = vpop.f32.mrb[0].mxu0
      %v2510 = vadd.f32 %v2317, %v2509
      %v2511 = vpop.f32.mrb[0].mxu0
      %v2512 = vand.u32 %v519, 4294901760
      %v2513 = vsub.f32 %v519, %v2512
      %2514 = vmatprep.mubr.f32.mxu0 %v2513
      %v2515 = vand.u32 %v518, 4294901760
      %v2516 = vsub.f32 %v518, %v2515
      %2517 = vmatmul.mubr.f32.gmra.mrb[0].mxu0 %v2516
      %v2518 = vpop.f32.mrb[0].mxu0
      %v2519 = vadd.f32 %v2324, %v2518
      %v2520 = vpop.f32.mrb[0].mxu0
      %v2521 = vand.u32 %v523, 4294901760
      %v2522 = vsub.f32 %v523, %v2521
      %2523 = vmatprep.mubr.f32.mxu0 %v2522
      %v2524 = vand.u32 %v522, 4294901760
      %v2525 = vsub.f32 %v522, %v2524
      %2526 = vmatmul.mubr.f32.gmra.mrb[0].mxu0 %v2525
      %v2527 = vpop.f32.mrb[0].mxu0
      %v2528 = vadd.f32 %v2331, %v2527
      %v2529 = vpop.f32.mrb[0].mxu0
      %v2530 = vand.u32 %v527, 4294901760
      %v2531 = vsub.f32 %v527, %v2530
      %2532 = vmatprep.mubr.f32.mxu0 %v2531
      %v2533 = vand.u32 %v526, 4294901760
      %v2534 = vsub.f32 %v526, %v2533
      %2535 = vmatmul.mubr.f32.gmra.mrb[0].mxu0 %v2534
      %v2536 = vpop.f32.mrb[0].mxu0
      %v2537 = vadd.f32 %v2338, %v2536
      %v2538 = vpop.f32.mrb[0].mxu0
      %v2539 = vand.u32 %v531, 4294901760
      %v2540 = vsub.f32 %v531, %v2539
      %2541 = vmatprep.mubr.f32.mxu0 %v2540
      %v2542 = vand.u32 %v530, 4294901760
      %v2543 = vsub.f32 %v530, %v2542
      %2544 = vmatmul.mubr.f32.gmra.mrb[0].mxu0 %v2543
      %v2545 = vpop.f32.mrb[0].mxu0
      %v2546 = vadd.f32 %v2345, %v2545
      %v2547 = vpop.f32.mrb[0].mxu0
      %2548 = vdwg.mxu0
      %2549 = vmatprep.subr.mxu0 0.0
      %v2550 = vand.u32 %v564, 4294901760
      %2551 = vmatpush1.msra.mxu0 %v2550
      %2552 = vmatprep.subr.mxu0 0.0
      %v2553 = vand.u32 %v565, 4294901760
      %2554 = vmatpush1.msra.mxu0 %v2553
      %2555 = vmatprep.subr.mxu0 0.0
      %v2556 = vand.u32 %v566, 4294901760
      %2557 = vmatpush1.msra.mxu0 %v2556
      %2558 = vmatprep.subr.mxu0 0.0
      %v2559 = vand.u32 %v567, 4294901760
      %2560 = vmatpush1.msra.mxu0 %v2559
      %2561 = vmatprep.subr.mxu0 0.0
      %v2562 = vand.u32 %v568, 4294901760
      %2563 = vmatpush1.msra.mxu0 %v2562
      %2564 = vmatprep.subr.mxu0 0.0
      %v2565 = vand.u32 %v569, 4294901760
      %2566 = vmatpush1.msra.mxu0 %v2565
      %2567 = vmatprep.subr.mxu0 0.0
      %v2568 = vand.u32 %v570, 4294901760
      %2569 = vmatpush1.msra.mxu0 %v2568
      %2570 = vmatprep.subr.mxu0 0.0
      %v2571 = vand.u32 %v571, 4294901760
      %2572 = vmatpush1.msra.mxu0 %v2571
      %2573 = vmatprep.subr.mxu0 0.0
      %v2574 = vand.u32 %v572, 4294901760
      %2575 = vmatpush1.msra.mxu0 %v2574
      %2576 = vmatprep.subr.mxu0 0.0
      %v2577 = vand.u32 %v573, 4294901760
      %2578 = vmatpush1.msra.mxu0 %v2577
      %2579 = vmatprep.subr.mxu0 0.0
      %v2580 = vand.u32 %v574, 4294901760
      %2581 = vmatpush1.msra.mxu0 %v2580
      %2582 = vmatprep.subr.mxu0 0.0
      %v2583 = vand.u32 %v575, 4294901760
      %2584 = vmatpush1.msra.mxu0 %v2583
      %2585 = vmatprep.subr.mxu0 0.0
      %v2586 = vand.u32 %v576, 4294901760
      %2587 = vmatpush1.msra.mxu0 %v2586
      %2588 = vmatprep.subr.mxu0 0.0
      %v2589 = vand.u32 %v577, 4294901760
      %2590 = vmatpush1.msra.mxu0 %v2589
      %2591 = vmatprep.subr.mxu0 0.0
      %v2592 = vand.u32 %v578, 4294901760
      %2593 = vmatpush1.msra.mxu0 %v2592
      %2594 = vmatprep.subr.mxu0 0.0
      %v2595 = vand.u32 %v579, 4294901760
      %2596 = vmatpush1.msra.mxu0 %v2595
      %2597 = vmatprep.subr.mxu0 0.0
      %v2598 = vand.u32 %v580, 4294901760
      %2599 = vmatpush1.msra.mxu0 %v2598
      %2600 = vmatprep.subr.mxu0 0.0
      %v2601 = vand.u32 %v581, 4294901760
      %2602 = vmatpush1.msra.mxu0 %v2601
      %2603 = vmatprep.subr.mxu0 0.0
      %v2604 = vand.u32 %v582, 4294901760
      %2605 = vmatpush1.msra.mxu0 %v2604
      %2606 = vmatprep.subr.mxu0 0.0
      %v2607 = vand.u32 %v583, 4294901760
      %2608 = vmatpush1.msra.mxu0 %v2607
      %2609 = vmatprep.subr.mxu0 0.0
      %v2610 = vand.u32 %v584, 4294901760
      %2611 = vmatpush1.msra.mxu0 %v2610
      %2612 = vmatprep.subr.mxu0 0.0
      %v2613 = vand.u32 %v585, 4294901760
      %2614 = vmatpush1.msra.mxu0 %v2613
      %2615 = vmatprep.subr.mxu0 0.0
      %v2616 = vand.u32 %v586, 4294901760
      %2617 = vmatpush1.msra.mxu0 %v2616
      %2618 = vmatprep.subr.mxu0 0.0
      %v2619 = vand.u32 %v587, 4294901760
      %2620 = vmatpush1.msra.mxu0 %v2619
      %2621 = vmatprep.subr.mxu0 0.0
      %v2622 = vand.u32 %v588, 4294901760
      %2623 = vmatpush1.msra.mxu0 %v2622
      %2624 = vmatprep.subr.mxu0 0.0
      %v2625 = vand.u32 %v589, 4294901760
      %2626 = vmatpush1.msra.mxu0 %v2625
      %2627 = vmatprep.subr.mxu0 0.0
      %v2628 = vand.u32 %v590, 4294901760
      %2629 = vmatpush1.msra.mxu0 %v2628
      %2630 = vmatprep.subr.mxu0 0.0
      %v2631 = vand.u32 %v591, 4294901760
      %2632 = vmatpush1.msra.mxu0 %v2631
      %2633 = vmatprep.subr.mxu0 0.0
      %v2634 = vand.u32 %v592, 4294901760
      %2635 = vmatpush1.msra.mxu0 %v2634
      %2636 = vmatprep.subr.mxu0 0.0
      %v2637 = vand.u32 %v593, 4294901760
      %2638 = vmatpush1.msra.mxu0 %v2637
      %2639 = vmatprep.subr.mxu0 0.0
      %v2640 = vand.u32 %v594, 4294901760
      %2641 = vmatpush1.msra.mxu0 %v2640
      %2642 = vmatprep.subr.mxu0 0.0
      %v2643 = vand.u32 %v595, 4294901760
      %2644 = vmatpush1.msra.mxu0 %v2643
      %v2645 = vand.u32 %v503, 4294901760
      %v2646 = vsub.f32 %v503, %v2645
      %v2647 = vand.u32 %v2646, 4294901760
      %2648 = vmatprep.mubr.f32.mxu0 %v2647
      %v2649 = vand.u32 %v502, 4294901760
      %v2650 = vsub.f32 %v502, %v2649
      %v2651 = vand.u32 %v2650, 4294901760
      %2652 = vmatmul.mubr.f32.gmra.mrb[0].mxu0 %v2651
      %v2653 = vpop.f32.mrb[0].mxu0
      %v2654 = vadd.f32 %v2483, %v2653
      %v2655 = vpop.f32.mrb[0].mxu0
      %v2656 = vand.u32 %v507, 4294901760
      %v2657 = vsub.f32 %v507, %v2656
      %v2658 = vand.u32 %v2657, 4294901760
      %2659 = vmatprep.mubr.f32.mxu0 %v2658
      %v2660 = vand.u32 %v506, 4294901760
      %v2661 = vsub.f32 %v506, %v2660
      %v2662 = vand.u32 %v2661, 4294901760
      %2663 = vmatmul.mubr.f32.gmra.mrb[0].mxu0 %v2662
      %v2664 = vpop.f32.mrb[0].mxu0
      %v2665 = vadd.f32 %v2492, %v2664
      %v2666 = vpop.f32.mrb[0].mxu0
      %v2667 = vand.u32 %v511, 4294901760
      %v2668 = vsub.f32 %v511, %v2667
      %v2669 = vand.u32 %v2668, 4294901760
      %2670 = vmatprep.mubr.f32.mxu0 %v2669
      %v2671 = vand.u32 %v510, 4294901760
      %v2672 = vsub.f32 %v510, %v2671
      %v2673 = vand.u32 %v2672, 4294901760
      %2674 = vmatmul.mubr.f32.gmra.mrb[0].mxu0 %v2673
      %v2675 = vpop.f32.mrb[0].mxu0
      %v2676 = vadd.f32 %v2501, %v2675
      %v2677 = vpop.f32.mrb[0].mxu0
      %v2678 = vand.u32 %v515, 4294901760
      %v2679 = vsub.f32 %v515, %v2678
      %v2680 = vand.u32 %v2679, 4294901760
      %2681 = vmatprep.mubr.f32.mxu0 %v2680
      %v2682 = vand.u32 %v514, 4294901760
      %v2683 = vsub.f32 %v514, %v2682
      %v2684 = vand.u32 %v2683, 4294901760
      %2685 = vmatmul.mubr.f32.gmra.mrb[0].mxu0 %v2684
      %v2686 = vpop.f32.mrb[0].mxu0
      %v2687 = vadd.f32 %v2510, %v2686
      %v2688 = vpop.f32.mrb[0].mxu0
      %v2689 = vand.u32 %v519, 4294901760
      %v2690 = vsub.f32 %v519, %v2689
      %v2691 = vand.u32 %v2690, 4294901760
      %2692 = vmatprep.mubr.f32.mxu0 %v2691
      %v2693 = vand.u32 %v518, 4294901760
      %v2694 = vsub.f32 %v518, %v2693
      %v2695 = vand.u32 %v2694, 4294901760
      %2696 = vmatmul.mubr.f32.gmra.mrb[0].mxu0 %v2695
      %v2697 = vpop.f32.mrb[0].mxu0
      %v2698 = vadd.f32 %v2519, %v2697
      %v2699 = vpop.f32.mrb[0].mxu0
      %v2700 = vand.u32 %v523, 4294901760
      %v2701 = vsub.f32 %v523, %v2700
      %v2702 = vand.u32 %v2701, 4294901760
      %2703 = vmatprep.mubr.f32.mxu0 %v2702
      %v2704 = vand.u32 %v522, 4294901760
      %v2705 = vsub.f32 %v522, %v2704
      %v2706 = vand.u32 %v2705, 4294901760
      %2707 = vmatmul.mubr.f32.gmra.mrb[0].mxu0 %v2706
      %v2708 = vpop.f32.mrb[0].mxu0
      %v2709 = vadd.f32 %v2528, %v2708
      %v2710 = vpop.f32.mrb[0].mxu0
      %v2711 = vand.u32 %v527, 4294901760
      %v2712 = vsub.f32 %v527, %v2711
      %v2713 = vand.u32 %v2712, 4294901760
      %2714 = vmatprep.mubr.f32.mxu0 %v2713
      %v2715 = vand.u32 %v526, 4294901760
      %v2716 = vsub.f32 %v526, %v2715
      %v2717 = vand.u32 %v2716, 4294901760
      %2718 = vmatmul.mubr.f32.gmra.mrb[0].mxu0 %v2717
      %v2719 = vpop.f32.mrb[0].mxu0
      %v2720 = vadd.f32 %v2537, %v2719
      %v2721 = vpop.f32.mrb[0].mxu0
      %v2722 = vand.u32 %v531, 4294901760
      %v2723 = vsub.f32 %v531, %v2722
      %v2724 = vand.u32 %v2723, 4294901760
      %2725 = vmatprep.mubr.f32.mxu0 %v2724
      %v2726 = vand.u32 %v530, 4294901760
      %v2727 = vsub.f32 %v530, %v2726
      %v2728 = vand.u32 %v2727, 4294901760
      %2729 = vmatmul.mubr.f32.gmra.mrb[0].mxu0 %v2728
      %v2730 = vpop.f32.mrb[0].mxu0
      %v2731 = vadd.f32 %v2546, %v2730
      %v2732 = vpop.f32.mrb[0].mxu0
      %2733 = vdwg.mxu0
      %2734 = vmatprep.subr.mxu0 0.0
      %v2735 = vand.u32 %v564, 4294901760
      %v2736 = vsub.f32 %v564, %v2735
      %v2737 = vand.u32 %v2736, 4294901760
      %2738 = vmatpush1.msra.mxu0 %v2737
      %2739 = vmatprep.subr.mxu0 0.0
      %v2740 = vand.u32 %v565, 4294901760
      %v2741 = vsub.f32 %v565, %v2740
      %v2742 = vand.u32 %v2741, 4294901760
      %2743 = vmatpush1.msra.mxu0 %v2742
      %2744 = vmatprep.subr.mxu0 0.0
      %v2745 = vand.u32 %v566, 4294901760
      %v2746 = vsub.f32 %v566, %v2745
      %v2747 = vand.u32 %v2746, 4294901760
      %2748 = vmatpush1.msra.mxu0 %v2747
      %2749 = vmatprep.subr.mxu0 0.0
      %v2750 = vand.u32 %v567, 4294901760
      %v2751 = vsub.f32 %v567, %v2750
      %v2752 = vand.u32 %v2751, 4294901760
      %2753 = vmatpush1.msra.mxu0 %v2752
      %2754 = vmatprep.subr.mxu0 0.0
      %v2755 = vand.u32 %v568, 4294901760
      %v2756 = vsub.f32 %v568, %v2755
      %v2757 = vand.u32 %v2756, 4294901760
      %2758 = vmatpush1.msra.mxu0 %v2757
      %2759 = vmatprep.subr.mxu0 0.0
      %v2760 = vand.u32 %v569, 4294901760
      %v2761 = vsub.f32 %v569, %v2760
      %v2762 = vand.u32 %v2761, 4294901760
      %2763 = vmatpush1.msra.mxu0 %v2762
      %2764 = vmatprep.subr.mxu0 0.0
      %v2765 = vand.u32 %v570, 4294901760
      %v2766 = vsub.f32 %v570, %v2765
      %v2767 = vand.u32 %v2766, 4294901760
      %2768 = vmatpush1.msra.mxu0 %v2767
      %2769 = vmatprep.subr.mxu0 0.0
      %v2770 = vand.u32 %v571, 4294901760
      %v2771 = vsub.f32 %v571, %v2770
      %v2772 = vand.u32 %v2771, 4294901760
      %2773 = vmatpush1.msra.mxu0 %v2772
      %2774 = vmatprep.subr.mxu0 0.0
      %v2775 = vand.u32 %v572, 4294901760
      %v2776 = vsub.f32 %v572, %v2775
      %v2777 = vand.u32 %v2776, 4294901760
      %2778 = vmatpush1.msra.mxu0 %v2777
      %2779 = vmatprep.subr.mxu0 0.0
      %v2780 = vand.u32 %v573, 4294901760
      %v2781 = vsub.f32 %v573, %v2780
      %v2782 = vand.u32 %v2781, 4294901760
      %2783 = vmatpush1.msra.mxu0 %v2782
      %2784 = vmatprep.subr.mxu0 0.0
      %v2785 = vand.u32 %v574, 4294901760
      %v2786 = vsub.f32 %v574, %v2785
      %v2787 = vand.u32 %v2786, 4294901760
      %2788 = vmatpush1.msra.mxu0 %v2787
      %2789 = vmatprep.subr.mxu0 0.0
      %v2790 = vand.u32 %v575, 4294901760
      %v2791 = vsub.f32 %v575, %v2790
      %v2792 = vand.u32 %v2791, 4294901760
      %2793 = vmatpush1.msra.mxu0 %v2792
      %2794 = vmatprep.subr.mxu0 0.0
      %v2795 = vand.u32 %v576, 4294901760
      %v2796 = vsub.f32 %v576, %v2795
      %v2797 = vand.u32 %v2796, 4294901760
      %2798 = vmatpush1.msra.mxu0 %v2797
      %2799 = vmatprep.subr.mxu0 0.0
      %v2800 = vand.u32 %v577, 4294901760
      %v2801 = vsub.f32 %v577, %v2800
      %v2802 = vand.u32 %v2801, 4294901760
      %2803 = vmatpush1.msra.mxu0 %v2802
      %2804 = vmatprep.subr.mxu0 0.0
      %v2805 = vand.u32 %v578, 4294901760
      %v2806 = vsub.f32 %v578, %v2805
      %v2807 = vand.u32 %v2806, 4294901760
      %2808 = vmatpush1.msra.mxu0 %v2807
      %2809 = vmatprep.subr.mxu0 0.0
      %v2810 = vand.u32 %v579, 4294901760
      %v2811 = vsub.f32 %v579, %v2810
      %v2812 = vand.u32 %v2811, 4294901760
      %2813 = vmatpush1.msra.mxu0 %v2812
      %2814 = vmatprep.subr.mxu0 0.0
      %v2815 = vand.u32 %v580, 4294901760
      %v2816 = vsub.f32 %v580, %v2815
      %v2817 = vand.u32 %v2816, 4294901760
      %2818 = vmatpush1.msra.mxu0 %v2817
      %2819 = vmatprep.subr.mxu0 0.0
      %v2820 = vand.u32 %v581, 4294901760
      %v2821 = vsub.f32 %v581, %v2820
      %v2822 = vand.u32 %v2821, 4294901760
      %2823 = vmatpush1.msra.mxu0 %v2822
      %2824 = vmatprep.subr.mxu0 0.0
      %v2825 = vand.u32 %v582, 4294901760
      %v2826 = vsub.f32 %v582, %v2825
      %v2827 = vand.u32 %v2826, 4294901760
      %2828 = vmatpush1.msra.mxu0 %v2827
      %2829 = vmatprep.subr.mxu0 0.0
      %v2830 = vand.u32 %v583, 4294901760
      %v2831 = vsub.f32 %v583, %v2830
      %v2832 = vand.u32 %v2831, 4294901760
      %2833 = vmatpush1.msra.mxu0 %v2832
      %2834 = vmatprep.subr.mxu0 0.0
      %v2835 = vand.u32 %v584, 4294901760
      %v2836 = vsub.f32 %v584, %v2835
      %v2837 = vand.u32 %v2836, 4294901760
      %2838 = vmatpush1.msra.mxu0 %v2837
      %2839 = vmatprep.subr.mxu0 0.0
      %v2840 = vand.u32 %v585, 4294901760
      %v2841 = vsub.f32 %v585, %v2840
      %v2842 = vand.u32 %v2841, 4294901760
      %2843 = vmatpush1.msra.mxu0 %v2842
      %2844 = vmatprep.subr.mxu0 0.0
      %v2845 = vand.u32 %v586, 4294901760
      %v2846 = vsub.f32 %v586, %v2845
      %v2847 = vand.u32 %v2846, 4294901760
      %2848 = vmatpush1.msra.mxu0 %v2847
      %2849 = vmatprep.subr.mxu0 0.0
      %v2850 = vand.u32 %v587, 4294901760
      %v2851 = vsub.f32 %v587, %v2850
      %v2852 = vand.u32 %v2851, 4294901760
      %2853 = vmatpush1.msra.mxu0 %v2852
      %2854 = vmatprep.subr.mxu0 0.0
      %v2855 = vand.u32 %v588, 4294901760
      %v2856 = vsub.f32 %v588, %v2855
      %v2857 = vand.u32 %v2856, 4294901760
      %2858 = vmatpush1.msra.mxu0 %v2857
      %2859 = vmatprep.subr.mxu0 0.0
      %v2860 = vand.u32 %v589, 4294901760
      %v2861 = vsub.f32 %v589, %v2860
      %v2862 = vand.u32 %v2861, 4294901760
      %2863 = vmatpush1.msra.mxu0 %v2862
      %2864 = vmatprep.subr.mxu0 0.0
      %v2865 = vand.u32 %v590, 4294901760
      %v2866 = vsub.f32 %v590, %v2865
      %v2867 = vand.u32 %v2866, 4294901760
      %2868 = vmatpush1.msra.mxu0 %v2867
      %2869 = vmatprep.subr.mxu0 0.0
      %v2870 = vand.u32 %v591, 4294901760
      %v2871 = vsub.f32 %v591, %v2870
      %v2872 = vand.u32 %v2871, 4294901760
      %2873 = vmatpush1.msra.mxu0 %v2872
      %2874 = vmatprep.subr.mxu0 0.0
      %v2875 = vand.u32 %v592, 4294901760
      %v2876 = vsub.f32 %v592, %v2875
      %v2877 = vand.u32 %v2876, 4294901760
      %2878 = vmatpush1.msra.mxu0 %v2877
      %2879 = vmatprep.subr.mxu0 0.0
      %v2880 = vand.u32 %v593, 4294901760
      %v2881 = vsub.f32 %v593, %v2880
      %v2882 = vand.u32 %v2881, 4294901760
      %2883 = vmatpush1.msra.mxu0 %v2882
      %2884 = vmatprep.subr.mxu0 0.0
      %v2885 = vand.u32 %v594, 4294901760
      %v2886 = vsub.f32 %v594, %v2885
      %v2887 = vand.u32 %v2886, 4294901760
      %2888 = vmatpush1.msra.mxu0 %v2887
      %2889 = vmatprep.subr.mxu0 0.0
      %v2890 = vand.u32 %v595, 4294901760
      %v2891 = vsub.f32 %v595, %v2890
      %v2892 = vand.u32 %v2891, 4294901760
      %2893 = vmatpush1.msra.mxu0 %v2892
      %v2894 = vand.u32 %v503, 4294901760
      %2895 = vmatprep.mubr.f32.mxu0 %v2894
      %v2896 = vand.u32 %v502, 4294901760
      %2897 = vmatmul.mubr.f32.gmra.mrb[0].mxu0 %v2896
      %v2898 = vpop.f32.mrb[0].mxu0
      %v2899 = vadd.f32 %v2654, %v2898
      %v2900 = vpop.f32.mrb[0].mxu0
      %v2901 = vand.u32 %v507, 4294901760
      %2902 = vmatprep.mubr.f32.mxu0 %v2901
      %v2903 = vand.u32 %v506, 4294901760
      %2904 = vmatmul.mubr.f32.gmra.mrb[0].mxu0 %v2903
      %v2905 = vpop.f32.mrb[0].mxu0
      %v2906 = vadd.f32 %v2665, %v2905
      %v2907 = vpop.f32.mrb[0].mxu0
      %v2908 = vand.u32 %v511, 4294901760
      %2909 = vmatprep.mubr.f32.mxu0 %v2908
      %v2910 = vand.u32 %v510, 4294901760
      %2911 = vmatmul.mubr.f32.gmra.mrb[0].mxu0 %v2910
      %v2912 = vpop.f32.mrb[0].mxu0
      %v2913 = vadd.f32 %v2676, %v2912
      %v2914 = vpop.f32.mrb[0].mxu0
      %v2915 = vand.u32 %v515, 4294901760
      %2916 = vmatprep.mubr.f32.mxu0 %v2915
      %v2917 = vand.u32 %v514, 4294901760
      %2918 = vmatmul.mubr.f32.gmra.mrb[0].mxu0 %v2917
      %v2919 = vpop.f32.mrb[0].mxu0
      %v2920 = vadd.f32 %v2687, %v2919
      %v2921 = vpop.f32.mrb[0].mxu0
      %v2922 = vand.u32 %v519, 4294901760
      %2923 = vmatprep.mubr.f32.mxu0 %v2922
      %v2924 = vand.u32 %v518, 4294901760
      %2925 = vmatmul.mubr.f32.gmra.mrb[0].mxu0 %v2924
      %v2926 = vpop.f32.mrb[0].mxu0
      %v2927 = vadd.f32 %v2698, %v2926
      %v2928 = vpop.f32.mrb[0].mxu0
      %v2929 = vand.u32 %v523, 4294901760
      %2930 = vmatprep.mubr.f32.mxu0 %v2929
      %v2931 = vand.u32 %v522, 4294901760
      %2932 = vmatmul.mubr.f32.gmra.mrb[0].mxu0 %v2931
      %v2933 = vpop.f32.mrb[0].mxu0
      %v2934 = vadd.f32 %v2709, %v2933
      %v2935 = vpop.f32.mrb[0].mxu0
      %v2936 = vand.u32 %v527, 4294901760
      %2937 = vmatprep.mubr.f32.mxu0 %v2936
      %v2938 = vand.u32 %v526, 4294901760
      %2939 = vmatmul.mubr.f32.gmra.mrb[0].mxu0 %v2938
      %v2940 = vpop.f32.mrb[0].mxu0
      %v2941 = vadd.f32 %v2720, %v2940
      %v2942 = vpop.f32.mrb[0].mxu0
      %v2943 = vand.u32 %v531, 4294901760
      %2944 = vmatprep.mubr.f32.mxu0 %v2943
      %v2945 = vand.u32 %v530, 4294901760
      %2946 = vmatmul.mubr.f32.gmra.mrb[0].mxu0 %v2945
      %v2947 = vpop.f32.mrb[0].mxu0
      %v2948 = vadd.f32 %v2731, %v2947
      %v2949 = vpop.f32.mrb[0].mxu0
      %2950 = vdwg.mxu0
      %2951 = vmatprep.subr.mxu0 0.0
      %v2952 = vand.u32 %v564, 4294901760
      %2953 = vmatpush1.msra.mxu0 %v2952
      %2954 = vmatprep.subr.mxu0 0.0
      %v2955 = vand.u32 %v565, 4294901760
      %2956 = vmatpush1.msra.mxu0 %v2955
      %2957 = vmatprep.subr.mxu0 0.0
      %v2958 = vand.u32 %v566, 4294901760
      %2959 = vmatpush1.msra.mxu0 %v2958
      %2960 = vmatprep.subr.mxu0 0.0
      %v2961 = vand.u32 %v567, 4294901760
      %2962 = vmatpush1.msra.mxu0 %v2961
      %2963 = vmatprep.subr.mxu0 0.0
      %v2964 = vand.u32 %v568, 4294901760
      %2965 = vmatpush1.msra.mxu0 %v2964
      %2966 = vmatprep.subr.mxu0 0.0
      %v2967 = vand.u32 %v569, 4294901760
      %2968 = vmatpush1.msra.mxu0 %v2967
      %2969 = vmatprep.subr.mxu0 0.0
      %v2970 = vand.u32 %v570, 4294901760
      %2971 = vmatpush1.msra.mxu0 %v2970
      %2972 = vmatprep.subr.mxu0 0.0
      %v2973 = vand.u32 %v571, 4294901760
      %2974 = vmatpush1.msra.mxu0 %v2973
      %2975 = vmatprep.subr.mxu0 0.0
      %v2976 = vand.u32 %v572, 4294901760
      %2977 = vmatpush1.msra.mxu0 %v2976
      %2978 = vmatprep.subr.mxu0 0.0
      %v2979 = vand.u32 %v573, 4294901760
      %2980 = vmatpush1.msra.mxu0 %v2979
      %2981 = vmatprep.subr.mxu0 0.0
      %v2982 = vand.u32 %v574, 4294901760
      %2983 = vmatpush1.msra.mxu0 %v2982
      %2984 = vmatprep.subr.mxu0 0.0
      %v2985 = vand.u32 %v575, 4294901760
      %2986 = vmatpush1.msra.mxu0 %v2985
      %2987 = vmatprep.subr.mxu0 0.0
      %v2988 = vand.u32 %v576, 4294901760
      %2989 = vmatpush1.msra.mxu0 %v2988
      %2990 = vmatprep.subr.mxu0 0.0
      %v2991 = vand.u32 %v577, 4294901760
      %2992 = vmatpush1.msra.mxu0 %v2991
      %2993 = vmatprep.subr.mxu0 0.0
      %v2994 = vand.u32 %v578, 4294901760
      %2995 = vmatpush1.msra.mxu0 %v2994
      %2996 = vmatprep.subr.mxu0 0.0
      %v2997 = vand.u32 %v579, 4294901760
      %2998 = vmatpush1.msra.mxu0 %v2997
      %2999 = vmatprep.subr.mxu0 0.0
      %v3000 = vand.u32 %v580, 4294901760
      %3001 = vmatpush1.msra.mxu0 %v3000
      %3002 = vmatprep.subr.mxu0 0.0
      %v3003 = vand.u32 %v581, 4294901760
      %3004 = vmatpush1.msra.mxu0 %v3003
      %3005 = vmatprep.subr.mxu0 0.0
      %v3006 = vand.u32 %v582, 4294901760
      %3007 = vmatpush1.msra.mxu0 %v3006
      %3008 = vmatprep.subr.mxu0 0.0
      %v3009 = vand.u32 %v583, 4294901760
      %3010 = vmatpush1.msra.mxu0 %v3009
      %3011 = vmatprep.subr.mxu0 0.0
      %v3012 = vand.u32 %v584, 4294901760
      %3013 = vmatpush1.msra.mxu0 %v3012
      %3014 = vmatprep.subr.mxu0 0.0
      %v3015 = vand.u32 %v585, 4294901760
      %3016 = vmatpush1.msra.mxu0 %v3015
      %3017 = vmatprep.subr.mxu0 0.0
      %v3018 = vand.u32 %v586, 4294901760
      %3019 = vmatpush1.msra.mxu0 %v3018
      %3020 = vmatprep.subr.mxu0 0.0
      %v3021 = vand.u32 %v587, 4294901760
      %3022 = vmatpush1.msra.mxu0 %v3021
      %3023 = vmatprep.subr.mxu0 0.0
      %v3024 = vand.u32 %v588, 4294901760
      %3025 = vmatpush1.msra.mxu0 %v3024
      %3026 = vmatprep.subr.mxu0 0.0
      %v3027 = vand.u32 %v589, 4294901760
      %3028 = vmatpush1.msra.mxu0 %v3027
      %3029 = vmatprep.subr.mxu0 0.0
      %v3030 = vand.u32 %v590, 4294901760
      %3031 = vmatpush1.msra.mxu0 %v3030
      %3032 = vmatprep.subr.mxu0 0.0
      %v3033 = vand.u32 %v591, 4294901760
      %3034 = vmatpush1.msra.mxu0 %v3033
      %3035 = vmatprep.subr.mxu0 0.0
      %v3036 = vand.u32 %v592, 4294901760
      %3037 = vmatpush1.msra.mxu0 %v3036
      %3038 = vmatprep.subr.mxu0 0.0
      %v3039 = vand.u32 %v593, 4294901760
      %3040 = vmatpush1.msra.mxu0 %v3039
      %3041 = vmatprep.subr.mxu0 0.0
      %v3042 = vand.u32 %v594, 4294901760
      %3043 = vmatpush1.msra.mxu0 %v3042
      %3044 = vmatprep.subr.mxu0 0.0
      %v3045 = vand.u32 %v595, 4294901760
      %3046 = vmatpush1.msra.mxu0 %v3045
      %v3047 = vand.u32 %v503, 4294901760
      %3048 = vmatprep.mubr.f32.mxu0 %v3047
      %v3049 = vand.u32 %v502, 4294901760
      %3050 = vmatmul.mubr.f32.gmra.mrb[0].mxu0 %v3049
      %v3051 = vpop.f32.mrb[0].mxu0
      %v3052 = vadd.f32 %v2899, %v3051
      %v3053 = vpop.f32.mrb[0].mxu0
      %v3054 = vand.u32 %v507, 4294901760
      %3055 = vmatprep.mubr.f32.mxu0 %v3054
      %v3056 = vand.u32 %v506, 4294901760
      %3057 = vmatmul.mubr.f32.gmra.mrb[0].mxu0 %v3056
      %v3058 = vpop.f32.mrb[0].mxu0
      %v3059 = vadd.f32 %v2906, %v3058
      %v3060 = vpop.f32.mrb[0].mxu0
      %v3061 = vand.u32 %v511, 4294901760
      %3062 = vmatprep.mubr.f32.mxu0 %v3061
      %v3063 = vand.u32 %v510, 4294901760
      %3064 = vmatmul.mubr.f32.gmra.mrb[0].mxu0 %v3063
      %v3065 = vpop.f32.mrb[0].mxu0
      %v3066 = vadd.f32 %v2913, %v3065
      %v3067 = vpop.f32.mrb[0].mxu0
      %v3068 = vand.u32 %v515, 4294901760
      %3069 = vmatprep.mubr.f32.mxu0 %v3068
      %v3070 = vand.u32 %v514, 4294901760
      %3071 = vmatmul.mubr.f32.gmra.mrb[0].mxu0 %v3070
      %v3072 = vpop.f32.mrb[0].mxu0
      %v3073 = vadd.f32 %v2920, %v3072
      %v3074 = vpop.f32.mrb[0].mxu0
      %v3075 = vand.u32 %v519, 4294901760
      %3076 = vmatprep.mubr.f32.mxu0 %v3075
      %v3077 = vand.u32 %v518, 4294901760
      %3078 = vmatmul.mubr.f32.gmra.mrb[0].mxu0 %v3077
      %v3079 = vpop.f32.mrb[0].mxu0
      %v3080 = vadd.f32 %v2927, %v3079
      %v3081 = vpop.f32.mrb[0].mxu0
      %v3082 = vand.u32 %v523, 4294901760
      %3083 = vmatprep.mubr.f32.mxu0 %v3082
      %v3084 = vand.u32 %v522, 4294901760
      %3085 = vmatmul.mubr.f32.gmra.mrb[0].mxu0 %v3084
      %v3086 = vpop.f32.mrb[0].mxu0
      %v3087 = vadd.f32 %v2934, %v3086
      %v3088 = vpop.f32.mrb[0].mxu0
      %v3089 = vand.u32 %v527, 4294901760
      %3090 = vmatprep.mubr.f32.mxu0 %v3089
      %v3091 = vand.u32 %v526, 4294901760
      %3092 = vmatmul.mubr.f32.gmra.mrb[0].mxu0 %v3091
      %v3093 = vpop.f32.mrb[0].mxu0
      %v3094 = vadd.f32 %v2941, %v3093
      %v3095 = vpop.f32.mrb[0].mxu0
      %v3096 = vand.u32 %v531, 4294901760
      %3097 = vmatprep.mubr.f32.mxu0 %v3096
      %v3098 = vand.u32 %v530, 4294901760
      %3099 = vmatmul.mubr.f32.gmra.mrb[0].mxu0 %v3098
      %v3100 = vpop.f32.mrb[0].mxu0
      %v3101 = vadd.f32 %v2948, %v3100
      %v3102 = vpop.f32.mrb[0].mxu0
      %3103 = vdwg.mxu0
      %v3104 = vld [vmem:[%s219] sm:$0xff]
      %v3105 = vld [vmem:[%s219 + $0x8] sm:$0xff]
      %v3106 = vld [vmem:[%s219 + $0x10] sm:$0xff]
      %v3107 = vld [vmem:[%s219 + $0x18] sm:$0xff]
      %v3108 = vld [vmem:[%s219 + $0x20] sm:$0xff]
      %v3109 = vld [vmem:[%s219 + $0x28] sm:$0xff]
      %v3110 = vld [vmem:[%s219 + $0x30] sm:$0xff]
      %v3111 = vld [vmem:[%s219 + $0x38] sm:$0xff]
      %v3112 = vadd.f32 %v3104, %v3052
      %v3113 = vadd.f32 %v3105, %v3059
      %v3114 = vadd.f32 %v3106, %v3066
      %v3115 = vadd.f32 %v3107, %v3073
      %v3116 = vadd.f32 %v3108, %v3080
      %v3117 = vadd.f32 %v3109, %v3087
      %v3118 = vadd.f32 %v3110, %v3094
      %v3119 = vadd.f32 %v3111, %v3101
      %vm3120 = vcmask 261120
      %3121 = vst.msk [vmem:[%s224] sm:$0xff] %vm3120, %v3112
      %3122 = vst.msk [vmem:[%s224 + $0x8] sm:$0xff] %vm3120, %v3113
      %3123 = vst.msk [vmem:[%s224 + $0x10] sm:$0xff] %vm3120, %v3114
      %3124 = vst.msk [vmem:[%s224 + $0x18] sm:$0xff] %vm3120, %v3115
      %3125 = vst.msk [vmem:[%s224 + $0x20] sm:$0xff] %vm3120, %v3116
      %3126 = vst.msk [vmem:[%s224 + $0x28] sm:$0xff] %vm3120, %v3117
      %3127 = vst.msk [vmem:[%s224 + $0x30] sm:$0xff] %vm3120, %v3118
      %3128 = vst.msk [vmem:[%s224 + $0x38] sm:$0xff] %vm3120, %v3119
      %p3129 = scmp.lt.s32.totalorder %s16, 1
      %s3130 = scalar_select %p3129, %s16, 1
      %s3131 = smul.addr %s3130, 8
      %s3132 = smul.addr %s3131, 8
      %s3133 = scalar_lea.vmem %s5, %s3132
      // Predicated region
      $region41: #{tpu_custom_call.1} parent=39 // pred_check
        %p3134 = pneg %p144
      $region42: #{tpu_custom_call.1} parent=39 // pred_check_branch
        %3136 = sbr.rel (%p3134) target = $region44
      $region43: #{tpu_custom_call.1} parent=39 // pred_region
        _
      $region44: #{tpu_custom_call.1} parent=39 // pred_fallthru
        _
    $region40: #{tpu_custom_call.1} parent=5 // pred_fallthru
      _
    %p3137 = scmp.le.s32.totalorder 2, %s11
    // Predicated region
    $region45: #{tpu_custom_call.1} parent=5 // pred_check
      %p3138 = pneg %p3137
    $region46: #{tpu_custom_call.1} parent=5 // pred_check_branch
      %3140 = sbr.rel (%p3138) target = $region48
    $region47: #{tpu_custom_call.1} parent=5 // pred_region
      %s3141 = ssub.s32 %s11, 2
      // Predicated region
      $region49: #{tpu_custom_call.1} parent=47 // pred_check
        %p3142 = pneg %p150
      $region50: #{tpu_custom_call.1} parent=47 // pred_check_branch
        %3144 = sbr.rel (%p3142) target = $region52
      $region51: #{tpu_custom_call.1} parent=47 // pred_region
        %p3145 = scmp.lt.s32.totalorder %s17, 1
        %s3146 = scalar_select %p3145, %s17, 1
        %s3147 = smul.addr %s3146, 8
        %s3148 = smul.addr %s3147, 8
        %s3149 = scalar_lea.vmem %s5, %s3148
      $region52: #{tpu_custom_call.1} parent=47 // pred_fallthru
        _
    $region48: #{tpu_custom_call.1} parent=5 // pred_fallthru
      _
  $region6: #{tpu_custom_call.1} parent=0 // loop_footer
    %s15 = sadd.s32 1, %s11
  $region7: #{tpu_custom_call.1} parent=0 // loop_footer_branch
    %10 = sbr.rel target = $region3
  $region8: #{tpu_custom_call.1} parent=0 // loop_exit
    _

</llo_original>
